<compile_context>
chip_gen: v7x
topology: tpu7x:2x2x1
jax: 0.10.0
libtpu: 0.0.40
codegen_flags: <defaults>
</compile_context>

<pallas_src>
import functools

import jax
import jax.numpy as jnp
from jax.experimental import pallas as pl
from jax.experimental.pallas import tpu as pltpu

BN_EPS = 1e-5


# --------------------------------------------------------------------------- helpers

def _swish(x, half_exb):
    # x * sigmoid((1+beta)*x) == x * 0.5 * (1 + tanh(0.5*(1+beta)*x))
    # tanh is a single EUP push (sigmoid would cost exp + reciprocal).
    return x * (0.5 + 0.5 * jnp.tanh(half_exb * x))


def _round_up(x, m):
    return ((x + m - 1) // m) * m


_APPLY_TILE_CANDS = (4096, 2048, 1024, 512, 256, 128, 64, 32, 16, 8)
_STATS_TILE_CANDS = (8192,) + _APPLY_TILE_CANDS


def _choose_apply_tile(b):
    """Largest batch tile giving >=2 grid steps (v7x megacore) and <=12.5% padding."""
    if b <= 8:
        return 8
    for t in _APPLY_TILE_CANDS:
        bp = _round_up(b, t)
        if bp // t < 2:            # need >=2 grid steps so both v7x TCs get work
            continue
        if (bp - b) * 8 > b:       # padding waste > 12.5% -> try a smaller tile
            continue
        return t
    return 8


def _choose_stats_tile(b_pad, apply_tile):
    """Stats passes are per-step-overhead dominated: use a 4-8x fatter tile."""
    cap = min(b_pad, 8 * apply_tile, 8192)
    for t in _STATS_TILE_CANDS:
        if t <= cap and b_pad % t == 0:
            return t
    return apply_tile


# --------------------------------------------------------------------------- kernels

def _stats1_kernel(z_ref, w1_ref, b1_ref, hexb1_ref, o_ref, *, b_true):
    """Per-tile partial [sum(h1), sum(h1^2)] of h1 = Swish(Linear1(z)), lane-dense."""
    x = z_ref[...].astype(jnp.float32)
    h = jnp.dot(x, w1_ref[...], preferred_element_type=jnp.float32) + b1_ref[...]
    h = _swish(h, hexb1_ref[...])

    tb = h.shape[0]
    rows = pl.program_id(0) * tb + jax.lax.broadcasted_iota(jnp.int32, (1, tb), 1)
    mask = (rows < b_true).astype(jnp.float32)            # zero padded rows
    hh = jnp.concatenate([h, h * h], axis=1)              # (tb, 2H) lane concat
    s = jnp.dot(mask, hh, preferred_element_type=jnp.float32)   # (1, 2H) on MXU
    o_ref[...] = s.reshape(o_ref.shape)


def _stats2_kernel(z_ref, w1_ref, b1_ref, hexb1_ref, m1_ref, r1_ref,
                   w2_ref, b2_ref, hexb2_ref, o_ref, *, b_true):
    """Per-tile partial [sum(h2), sum(h2^2)] of h2 = Swish(Linear2(BN1(h1)))."""
    x = z_ref[...].astype(jnp.float32)
    h = jnp.dot(x, w1_ref[...], preferred_element_type=jnp.float32) + b1_ref[...]
    h = _swish(h, hexb1_ref[...])
    h = (h - m1_ref[...]) * r1_ref[...]                    # BN1 (full-batch stats)
    h = jnp.dot(h, w2_ref[...], preferred_element_type=jnp.float32) + b2_ref[...]
    h = _swish(h, hexb2_ref[...])

    tb = h.shape[0]
    rows = pl.program_id(0) * tb + jax.lax.broadcasted_iota(jnp.int32, (1, tb), 1)
    mask = (rows < b_true).astype(jnp.float32)
    hh = jnp.concatenate([h, h * h], axis=1)
    s = jnp.dot(mask, hh, preferred_element_type=jnp.float32)
    o_ref[...] = s.reshape(o_ref.shape)


def _apply_kernel(z_ref, w1_ref, b1_ref, hexb1_ref, m1_ref, r1_ref,
                  w2_ref, b2_ref, hexb2_ref, m2_ref, r2_ref,
                  w3_ref, b3_ref, o_ref):
    """Full forward for one batch tile, using precomputed full-batch BN stats."""
    x = z_ref[...].astype(jnp.float32)
    h = jnp.dot(x, w1_ref[...], preferred_element_type=jnp.float32) + b1_ref[...]
    h = _swish(h, hexb1_ref[...])
    h = (h - m1_ref[...]) * r1_ref[...]
    h = jnp.dot(h, w2_ref[...], preferred_element_type=jnp.float32) + b2_ref[...]
    h = _swish(h, hexb2_ref[...])
    h = (h - m2_ref[...]) * r2_ref[...]
    out = jnp.dot(h, w3_ref[...], preferred_element_type=jnp.float32) + b3_ref[...]
    o_ref[...] = jnp.maximum(out, 0.0).astype(o_ref.dtype)   # last-layer ReLU


# --------------------------------------------------------------------------- wrapper

def fc_decoder_forward(z, params, *, out_dtype=jnp.float32):
    """FCDecoder forward.  z: (B, nstyle) -> spec: (B, dim_out).

    out_dtype=jnp.bfloat16 is the primary perf knob for large B (pass 3 is HBM
    writeback bound; bf16 halves the dominant DMA).  Default is float32 so the
    result matches the PyTorch/f32 reference bit-for-tolerance.
    """
    B, ns = z.shape
    H = params["w1"].shape[1]
    dim_out = params["w3"].shape[1]

    apply_tile = _choose_apply_tile(B)
    b_pad = _round_up(B, apply_tile)
    stats_tile = _choose_stats_tile(b_pad, apply_tile)
    n_apply = b_pad // apply_tile
    n_stats = b_pad // stats_tile
    inv_b = 1.0 / float(B)

    z_pad = jnp.pad(z, ((0, b_pad - B), (0, 0))) if b_pad != B else z

    # Precompute 0.5 * (1 + beta) once (tanh-form Swish).
    hexb1 = (0.5 * (1.0 + params["beta1"])).astype(jnp.float32)
    hexb2 = (0.5 * (1.0 + params["beta2"])).astype(jnp.float32)

    def const_spec(shape):
        nd = len(shape)
        return pl.BlockSpec(shape, lambda i, _nd=nd: (0,) * _nd)

    cparams = pltpu.CompilerParams(
        dimension_semantics=("parallel",),          # per-tile work is independent
        vmem_limit_bytes=32 * 1024 * 1024,          # v5e scoped default is only 16 MiB
    )

    z_stats_spec = pl.BlockSpec((stats_tile, ns), lambda i: (i, 0))
    stats_out_spec = pl.BlockSpec((1, 1, 2 * H), lambda i: (i, 0, 0))
    stats_out_shape = jax.ShapeDtypeStruct((n_stats, 1, 2 * H), jnp.float32)

    def bn_stats(partials):
        s = jnp.sum(partials, axis=(0, 1))                 # (2H,)
        mean = (s[:H] * inv_b).reshape(1, H)
        ex2 = (s[H:] * inv_b).reshape(1, H)
        var = jnp.maximum(ex2 - mean * mean, 0.0)          # guard tiny negative var
        return mean, jax.lax.rsqrt(var + BN_EPS)

    # ---- pass 1: full-batch BN1 statistics (per-tile partials, reduced outside) ----
    args1 = (z_pad, params["w1"], params["b1"], hexb1)
    part1 = pl.pallas_call(
        functools.partial(_stats1_kernel, b_true=B),
        out_shape=stats_out_shape,
        grid=(n_stats,),
        in_specs=[z_stats_spec] + [const_spec(a.shape) for a in args1[1:]],
        out_specs=stats_out_spec,
        compiler_params=cparams,
    )(*args1)
    mean1, rstd1 = bn_stats(part1)

    # ---- pass 2: full-batch BN2 statistics ----
    args2 = (z_pad, params["w1"], params["b1"], hexb1, mean1, rstd1,
             params["w2"], params["b2"], hexb2)
    part2 = pl.pallas_call(
        functools.partial(_stats2_kernel, b_true=B),
        out_shape=stats_out_shape,
        grid=(n_stats,),
        in_specs=[z_stats_spec] + [const_spec(a.shape) for a in args2[1:]],
        out_specs=stats_out_spec,
        compiler_params=cparams,
    )(*args2)
    mean2, rstd2 = bn_stats(part2)

    # ---- pass 3: apply everything, write the (B, dim_out) spectrum (lane-dense) ----
    z_apply_spec = pl.BlockSpec((apply_tile, ns), lambda i: (i, 0))
    args3 = (z_pad, params["w1"], params["b1"], hexb1, mean1, rstd1,
             params["w2"], params["b2"], hexb2, mean2, rstd2,
             params["w3"], params["b3"])
    spec = pl.pallas_call(
        _apply_kernel,
        out_shape=jax.ShapeDtypeStruct((b_pad, dim_out), out_dtype),
        grid=(n_apply,),
        in_specs=[z_apply_spec] + [const_spec(a.shape) for a in args3[1:]],
        out_specs=pl.BlockSpec((apply_tile, dim_out), lambda i: (i, 0)),
        compiler_params=cparams,
    )(*args3)
    return spec[:B] if b_pad != B else spec


# --------------------------------------------------------------------------- params / reference

def init_params(key, nstyle=5, hidden_size=64, dim_out=256):
    """Deterministic synthetic init (PyTorch Linear-style uniform, Swish beta=3.0)."""
    k1, k2, k3, k4, k5, k6 = jax.random.split(key, 6)

    def linear_init(kw, kb, fan_in, fan_out):
        bound = 1.0 / jnp.sqrt(jnp.float32(fan_in))
        w = jax.random.uniform(kw, (fan_in, fan_out), jnp.float32, -bound, bound)
        b = jax.random.uniform(kb, (1, fan_out), jnp.float32, -bound, bound)
        return w, b

    w1, b1 = linear_init(k1, k2, nstyle, hidden_size)
    w2, b2 = linear_init(k3, k4, hidden_size, hidden_size)
    w3, b3 = linear_init(k5, k6, hidden_size, dim_out)
    # Swish init=1.0 -> init*4.0 = 4.0 -> beta = 4.0 - 1.0 = 3.0
    beta1 = jnp.full((1, hidden_size), 3.0, jnp.float32)
    beta2 = jnp.full((1, hidden_size), 3.0, jnp.float32)
    return {"w1": w1, "b1": b1, "beta1": beta1,
            "w2": w2, "b2": b2, "beta2": beta2,
            "w3": w3, "b3": b3}


def fc_decoder_reference(z, p):
    """Pure-JAX reference mirroring the PyTorch forward (training-mode BN)."""
    h = z @ p["w1"] + p["b1"]
    h = h * jax.nn.sigmoid((1.0 + p["beta1"]) * h)
    m = jnp.mean(h, axis=0, keepdims=True)
    v = jnp.mean((h - m) ** 2, axis=0, keepdims=True)
    h = (h - m) / jnp.sqrt(v + BN_EPS)
    h = h @ p["w2"] + p["b2"]
    h = h * jax.nn.sigmoid((1.0 + p["beta2"]) * h)
    m = jnp.mean(h, axis=0, keepdims=True)
    v = jnp.mean((h - m) ** 2, axis=0, keepdims=True)
    h = (h - m) / jnp.sqrt(v + BN_EPS)
    out = h @ p["w3"] + p["b3"]
    return jnp.maximum(out, 0.0)


if __name__ == "__main__":
    NSTYLE, HIDDEN, DIM_OUT = 5, 64, 256

    key = jax.random.PRNGKey(0)
    kz, kp, kz2 = jax.random.split(key, 3)
    params = init_params(kp, nstyle=NSTYLE, hidden_size=HIDDEN, dim_out=DIM_OUT)

    fwd = jax.jit(fc_decoder_forward)

    # Small, tile-aligned batch.
    z = jax.random.normal(kz, (8, NSTYLE), jnp.float32)
    spec = jax.block_until_ready(fwd(z, params))
    ref = fc_decoder_reference(z, params)
    assert spec.shape == (8, DIM_OUT)
    assert jnp.allclose(spec, ref, atol=3e-4, rtol=3e-4), "mismatch vs JAX reference (B=8)"

    # Non-multiple-of-8 batch: exercises padding, masked BN statistics, multi-tile grid.
    z2 = jax.random.normal(kz2, (50, NSTYLE), jnp.float32)
    spec2 = jax.block_until_ready(fwd(z2, params))
    ref2 = fc_decoder_reference(z2, params)
    assert spec2.shape == (50, DIM_OUT)
    assert jnp.allclose(spec2, ref2, atol=3e-4, rtol=3e-4), "mismatch vs JAX reference (B=50)"

    print("KERNEL_OK")
</pallas_src>

<mosaic_0001>
module attributes {stable_mosaic.version = 11 : i64} {
  func.func @_stats1_kernel(%arg0: i32, %arg1: memref<8x5xf32, #tpu.memory_space<vmem>>, %arg2: memref<5x64xf32, #tpu.memory_space<vmem>>, %arg3: memref<1x64xf32, #tpu.memory_space<vmem>>, %arg4: memref<1x64xf32, #tpu.memory_space<vmem>>, %arg5: memref<1x1x128xf32, #tpu.memory_space<vmem>>) attributes {dimension_semantics = [#tpu.dimension_semantics<parallel>], iteration_bounds = array<i64: 1>, scalar_prefetch = 0 : i64, scratch_operands = 0 : i64, tpu.core_type = #tpu.core_type<tc>, window_params = [{transform_indices = @transform_0, window_bounds = array<i64: 8, 5>}, {pipeline_mode = #tpu.pipeline_mode<synchronous>, transform_indices = @transform_1, window_bounds = array<i64: 5, 64>}, {pipeline_mode = #tpu.pipeline_mode<synchronous>, transform_indices = @transform_2, window_bounds = array<i64: 1, 64>}, {pipeline_mode = #tpu.pipeline_mode<synchronous>, transform_indices = @transform_3, window_bounds = array<i64: 1, 64>}, {transform_indices = @transform_4, window_bounds = array<i64: 1, 1, 128>}]} {
    %c0 = arith.constant 0 : index
    %c0_0 = arith.constant 0 : index
    %0 = vector.load %arg1[%c0, %c0_0] : memref<8x5xf32, #tpu.memory_space<vmem>>, vector<8x5xf32>
    %c0_1 = arith.constant 0 : index
    %c0_2 = arith.constant 0 : index
    %1 = vector.load %arg2[%c0_1, %c0_2] : memref<5x64xf32, #tpu.memory_space<vmem>>, vector<5x64xf32>
    %cst = arith.constant dense<0.000000e+00> : vector<8x64xf32>
    %2 = tpu.matmul %0, %1, %cst {dimension_numbers = #tpu.dot_dimension_numbers<[1], [0], [0], [1], [0, 0, 1, 1], [], []>} : vector<8x5xf32>, vector<5x64xf32>, vector<8x64xf32> -> vector<8x64xf32>
    %c0_3 = arith.constant 0 : index
    %c0_4 = arith.constant 0 : index
    %3 = vector.load %arg3[%c0_3, %c0_4] : memref<1x64xf32, #tpu.memory_space<vmem>>, vector<1x64xf32>
    %4 = vector.broadcast %3 : vector<1x64xf32> to vector<8x64xf32>
    %5 = arith.addf %2, %4 : vector<8x64xf32>
    %c0_5 = arith.constant 0 : index
    %c0_6 = arith.constant 0 : index
    %6 = vector.load %arg4[%c0_5, %c0_6] : memref<1x64xf32, #tpu.memory_space<vmem>>, vector<1x64xf32>
    %7 = vector.broadcast %6 : vector<1x64xf32> to vector<8x64xf32>
    %8 = arith.mulf %7, %5 : vector<8x64xf32>
    %9 = math.tanh %8 : vector<8x64xf32>
    %cst_7 = arith.constant 5.000000e-01 : f32
    %10 = vector.broadcast %cst_7 : f32 to vector<8x64xf32>
    %11 = arith.mulf %10, %9 : vector<8x64xf32>
    %cst_8 = arith.constant 5.000000e-01 : f32
    %12 = vector.broadcast %cst_8 : f32 to vector<8x64xf32>
    %13 = arith.addf %12, %11 : vector<8x64xf32>
    %14 = arith.mulf %5, %13 : vector<8x64xf32>
    %c8_i32 = arith.constant 8 : i32
    %15 = arith.muli %arg0, %c8_i32 : i32
    %16 = tpu.iota {dimensions = array<i32: 1>} : vector<1x8xi32>
    %17 = vector.broadcast %15 : i32 to vector<1x8xi32>
    %18 = arith.addi %17, %16 : vector<1x8xi32>
    %c8_i32_9 = arith.constant 8 : i32
    %19 = vector.broadcast %c8_i32_9 : i32 to vector<1x8xi32>
    %20 = arith.cmpi slt, %18, %19 : vector<1x8xi32>
    %21 = arith.extui %20 : vector<1x8xi1> to vector<1x8xi32>
    %22 = arith.sitofp %21 : vector<1x8xi32> to vector<1x8xf32>
    %23 = arith.mulf %14, %14 : vector<8x64xf32>
    %24 = tpu.concatenate %14, %23 in 1 : vector<8x64xf32>, vector<8x64xf32> -> vector<8x128xf32>
    %cst_10 = arith.constant dense<0.000000e+00> : vector<1x128xf32>
    %25 = tpu.matmul %22, %24, %cst_10 {dimension_numbers = #tpu.dot_dimension_numbers<[1], [0], [0], [1], [0, 0, 1, 1], [], []>} : vector<1x8xf32>, vector<8x128xf32>, vector<1x128xf32> -> vector<1x128xf32>
    %26 = vector.shape_cast %25 : vector<1x128xf32> to vector<1x1x128xf32>
    %c0_11 = arith.constant 0 : index
    %c0_12 = arith.constant 0 : index
    %c0_13 = arith.constant 0 : index
    %27 = vector.load %arg5[%c0_11, %c0_12, %c0_13] : memref<1x1x128xf32, #tpu.memory_space<vmem>>, vector<1x1x128xf32>
    tpu.vector_store %arg5[%c0_11, %c0_12, %c0_13], %26 {strides = array<i32>} : memref<1x1x128xf32, #tpu.memory_space<vmem>>, vector<1x1x128xf32>,
    return
  }
  func.func @transform_0(%arg0: i32) -> (i32, i32) {
    %c0_i32 = arith.constant 0 : i32
    %c0_i32_0 = arith.constant 0 : i32
    return %arg0, %c0_i32 : i32, i32
  }
  func.func @transform_1(%arg0: i32) -> (i32, i32) {
    %c0_i32 = arith.constant 0 : i32
    %c0_i32_0 = arith.constant 0 : i32
    %c0_i32_1 = arith.constant 0 : i32
    return %c0_i32, %c0_i32_0 : i32, i32
  }
  func.func @transform_2(%arg0: i32) -> (i32, i32) {
    %c0_i32 = arith.constant 0 : i32
    %c0_i32_0 = arith.constant 0 : i32
    %c0_i32_1 = arith.constant 0 : i32
    return %c0_i32, %c0_i32_0 : i32, i32
  }
  func.func @transform_3(%arg0: i32) -> (i32, i32) {
    %c0_i32 = arith.constant 0 : i32
    %c0_i32_0 = arith.constant 0 : i32
    %c0_i32_1 = arith.constant 0 : i32
    return %c0_i32, %c0_i32_0 : i32, i32
  }
  func.func @transform_4(%arg0: i32) -> (i32, i32, i32) {
    %c0_i32 = arith.constant 0 : i32
    %c0_i32_0 = arith.constant 0 : i32
    %c0_i32_1 = arith.constant 0 : i32
    return %arg0, %c0_i32, %c0_i32_0 : i32, i32, i32
  }
}

module attributes {stable_mosaic.version = 11 : i64} {
  func.func @_stats2_kernel(%arg0: i32, %arg1: memref<8x5xf32, #tpu.memory_space<vmem>>, %arg2: memref<5x64xf32, #tpu.memory_space<vmem>>, %arg3: memref<1x64xf32, #tpu.memory_space<vmem>>, %arg4: memref<1x64xf32, #tpu.memory_space<vmem>>, %arg5: memref<1x64xf32, #tpu.memory_space<vmem>>, %arg6: memref<1x64xf32, #tpu.memory_space<vmem>>, %arg7: memref<64x64xf32, #tpu.memory_space<vmem>>, %arg8: memref<1x64xf32, #tpu.memory_space<vmem>>, %arg9: memref<1x64xf32, #tpu.memory_space<vmem>>, %arg10: memref<1x1x128xf32, #tpu.memory_space<vmem>>) attributes {dimension_semantics = [#tpu.dimension_semantics<parallel>], iteration_bounds = array<i64: 1>, scalar_prefetch = 0 : i64, scratch_operands = 0 : i64, tpu.core_type = #tpu.core_type<tc>, window_params = [{transform_indices = @transform_0, window_bounds = array<i64: 8, 5>}, {pipeline_mode = #tpu.pipeline_mode<synchronous>, transform_indices = @transform_1, window_bounds = array<i64: 5, 64>}, {pipeline_mode = #tpu.pipeline_mode<synchronous>, transform_indices = @transform_2, window_bounds = array<i64: 1, 64>}, {pipeline_mode = #tpu.pipeline_mode<synchronous>, transform_indices = @transform_3, window_bounds = array<i64: 1, 64>}, {pipeline_mode = #tpu.pipeline_mode<synchronous>, transform_indices = @transform_4, window_bounds = array<i64: 1, 64>}, {pipeline_mode = #tpu.pipeline_mode<synchronous>, transform_indices = @transform_5, window_bounds = array<i64: 1, 64>}, {pipeline_mode = #tpu.pipeline_mode<synchronous>, transform_indices = @transform_6, window_bounds = array<i64: 64, 64>}, {pipeline_mode = #tpu.pipeline_mode<synchronous>, transform_indices = @transform_7, window_bounds = array<i64: 1, 64>}, {pipeline_mode = #tpu.pipeline_mode<synchronous>, transform_indices = @transform_8, window_bounds = array<i64: 1, 64>}, {transform_indices = @transform_9, window_bounds = array<i64: 1, 1, 128>}]} {
    %c0 = arith.constant 0 : index
    %c0_0 = arith.constant 0 : index
    %0 = vector.load %arg1[%c0, %c0_0] : memref<8x5xf32, #tpu.memory_space<vmem>>, vector<8x5xf32>
    %c0_1 = arith.constant 0 : index
    %c0_2 = arith.constant 0 : index
    %1 = vector.load %arg2[%c0_1, %c0_2] : memref<5x64xf32, #tpu.memory_space<vmem>>, vector<5x64xf32>
    %cst = arith.constant dense<0.000000e+00> : vector<8x64xf32>
    %2 = tpu.matmul %0, %1, %cst {dimension_numbers = #tpu.dot_dimension_numbers<[1], [0], [0], [1], [0, 0, 1, 1], [], []>} : vector<8x5xf32>, vector<5x64xf32>, vector<8x64xf32> -> vector<8x64xf32>
    %c0_3 = arith.constant 0 : index
    %c0_4 = arith.constant 0 : index
    %3 = vector.load %arg3[%c0_3, %c0_4] : memref<1x64xf32, #tpu.memory_space<vmem>>, vector<1x64xf32>
    %4 = vector.broadcast %3 : vector<1x64xf32> to vector<8x64xf32>
    %5 = arith.addf %2, %4 : vector<8x64xf32>
    %c0_5 = arith.constant 0 : index
    %c0_6 = arith.constant 0 : index
    %6 = vector.load %arg4[%c0_5, %c0_6] : memref<1x64xf32, #tpu.memory_space<vmem>>, vector<1x64xf32>
    %7 = vector.broadcast %6 : vector<1x64xf32> to vector<8x64xf32>
    %8 = arith.mulf %7, %5 : vector<8x64xf32>
    %9 = math.tanh %8 : vector<8x64xf32>
    %cst_7 = arith.constant 5.000000e-01 : f32
    %10 = vector.broadcast %cst_7 : f32 to vector<8x64xf32>
    %11 = arith.mulf %10, %9 : vector<8x64xf32>
    %cst_8 = arith.constant 5.000000e-01 : f32
    %12 = vector.broadcast %cst_8 : f32 to vector<8x64xf32>
    %13 = arith.addf %12, %11 : vector<8x64xf32>
    %14 = arith.mulf %5, %13 : vector<8x64xf32>
    %c0_9 = arith.constant 0 : index
    %c0_10 = arith.constant 0 : index
    %15 = vector.load %arg5[%c0_9, %c0_10] : memref<1x64xf32, #tpu.memory_space<vmem>>, vector<1x64xf32>
    %16 = vector.broadcast %15 : vector<1x64xf32> to vector<8x64xf32>
    %17 = arith.subf %14, %16 : vector<8x64xf32>
    %c0_11 = arith.constant 0 : index
    %c0_12 = arith.constant 0 : index
    %18 = vector.load %arg6[%c0_11, %c0_12] : memref<1x64xf32, #tpu.memory_space<vmem>>, vector<1x64xf32>
    %19 = vector.broadcast %18 : vector<1x64xf32> to vector<8x64xf32>
    %20 = arith.mulf %17, %19 : vector<8x64xf32>
    %c0_13 = arith.constant 0 : index
    %c0_14 = arith.constant 0 : index
    %21 = vector.load %arg7[%c0_13, %c0_14] : memref<64x64xf32, #tpu.memory_space<vmem>>, vector<64x64xf32>
    %cst_15 = arith.constant dense<0.000000e+00> : vector<8x64xf32>
    %22 = tpu.matmul %20, %21, %cst_15 {dimension_numbers = #tpu.dot_dimension_numbers<[1], [0], [0], [1], [0, 0, 1, 1], [], []>} : vector<8x64xf32>, vector<64x64xf32>, vector<8x64xf32> -> vector<8x64xf32>
    %c0_16 = arith.constant 0 : index
    %c0_17 = arith.constant 0 : index
    %23 = vector.load %arg8[%c0_16, %c0_17] : memref<1x64xf32, #tpu.memory_space<vmem>>, vector<1x64xf32>
    %24 = vector.broadcast %23 : vector<1x64xf32> to vector<8x64xf32>
    %25 = arith.addf %22, %24 : vector<8x64xf32>
    %c0_18 = arith.constant 0 : index
    %c0_19 = arith.constant 0 : index
    %26 = vector.load %arg9[%c0_18, %c0_19] : memref<1x64xf32, #tpu.memory_space<vmem>>, vector<1x64xf32>
    %27 = vector.broadcast %26 : vector<1x64xf32> to vector<8x64xf32>
    %28 = arith.mulf %27, %25 : vector<8x64xf32>
    %29 = math.tanh %28 : vector<8x64xf32>
    %cst_20 = arith.constant 5.000000e-01 : f32
    %30 = vector.broadcast %cst_20 : f32 to vector<8x64xf32>
    %31 = arith.mulf %30, %29 : vector<8x64xf32>
    %cst_21 = arith.constant 5.000000e-01 : f32
    %32 = vector.broadcast %cst_21 : f32 to vector<8x64xf32>
    %33 = arith.addf %32, %31 : vector<8x64xf32>
    %34 = arith.mulf %25, %33 : vector<8x64xf32>
    %c8_i32 = arith.constant 8 : i32
    %35 = arith.muli %arg0, %c8_i32 : i32
    %36 = tpu.iota {dimensions = array<i32: 1>} : vector<1x8xi32>
    %37 = vector.broadcast %35 : i32 to vector<1x8xi32>
    %38 = arith.addi %37, %36 : vector<1x8xi32>
    %c8_i32_22 = arith.constant 8 : i32
    %39 = vector.broadcast %c8_i32_22 : i32 to vector<1x8xi32>
    %40 = arith.cmpi slt, %38, %39 : vector<1x8xi32>
    %41 = arith.extui %40 : vector<1x8xi1> to vector<1x8xi32>
    %42 = arith.sitofp %41 : vector<1x8xi32> to vector<1x8xf32>
    %43 = arith.mulf %34, %34 : vector<8x64xf32>
    %44 = tpu.concatenate %34, %43 in 1 : vector<8x64xf32>, vector<8x64xf32> -> vector<8x128xf32>
    %cst_23 = arith.constant dense<0.000000e+00> : vector<1x128xf32>
    %45 = tpu.matmul %42, %44, %cst_23 {dimension_numbers = #tpu.dot_dimension_numbers<[1], [0], [0], [1], [0, 0, 1, 1], [], []>} : vector<1x8xf32>, vector<8x128xf32>, vector<1x128xf32> -> vector<1x128xf32>
    %46 = vector.shape_cast %45 : vector<1x128xf32> to vector<1x1x128xf32>
    %c0_24 = arith.constant 0 : index
    %c0_25 = arith.constant 0 : index
    %c0_26 = arith.constant 0 : index
    %47 = vector.load %arg10[%c0_24, %c0_25, %c0_26] : memref<1x1x128xf32, #tpu.memory_space<vmem>>, vector<1x1x128xf32>
    tpu.vector_store %arg10[%c0_24, %c0_25, %c0_26], %46 {strides = array<i32>} : memref<1x1x128xf32, #tpu.memory_space<vmem>>, vector<1x1x128xf32>,
    return
  }
  func.func @transform_0(%arg0: i32) -> (i32, i32) {
    %c0_i32 = arith.constant 0 : i32
    %c0_i32_0 = arith.constant 0 : i32
    return %arg0, %c0_i32 : i32, i32
  }
  func.func @transform_1(%arg0: i32) -> (i32, i32) {
    %c0_i32 = arith.constant 0 : i32
    %c0_i32_0 = arith.constant 0 : i32
    %c0_i32_1 = arith.constant 0 : i32
    return %c0_i32, %c0_i32_0 : i32, i32
  }
  func.func @transform_2(%arg0: i32) -> (i32, i32) {
    %c0_i32 = arith.constant 0 : i32
    %c0_i32_0 = arith.constant 0 : i32
    %c0_i32_1 = arith.constant 0 : i32
    return %c0_i32, %c0_i32_0 : i32, i32
  }
  func.func @transform_3(%arg0: i32) -> (i32, i32) {
    %c0_i32 = arith.constant 0 : i32
    %c0_i32_0 = arith.constant 0 : i32
    %c0_i32_1 = arith.constant 0 : i32
    return %c0_i32, %c0_i32_0 : i32, i32
  }
  func.func @transform_4(%arg0: i32) -> (i32, i32) {
    %c0_i32 = arith.constant 0 : i32
    %c0_i32_0 = arith.constant 0 : i32
    %c0_i32_1 = arith.constant 0 : i32
    return %c0_i32, %c0_i32_0 : i32, i32
  }
  func.func @transform_5(%arg0: i32) -> (i32, i32) {
    %c0_i32 = arith.constant 0 : i32
    %c0_i32_0 = arith.constant 0 : i32
    %c0_i32_1 = arith.constant 0 : i32
    return %c0_i32, %c0_i32_0 : i32, i32
  }
  func.func @transform_6(%arg0: i32) -> (i32, i32) {
    %c0_i32 = arith.constant 0 : i32
    %c0_i32_0 = arith.constant 0 : i32
    %c0_i32_1 = arith.constant 0 : i32
    return %c0_i32, %c0_i32_0 : i32, i32
  }
  func.func @transform_7(%arg0: i32) -> (i32, i32) {
    %c0_i32 = arith.constant 0 : i32
    %c0_i32_0 = arith.constant 0 : i32
    %c0_i32_1 = arith.constant 0 : i32
    return %c0_i32, %c0_i32_0 : i32, i32
  }
  func.func @transform_8(%arg0: i32) -> (i32, i32) {
    %c0_i32 = arith.constant 0 : i32
    %c0_i32_0 = arith.constant 0 : i32
    %c0_i32_1 = arith.constant 0 : i32
    return %c0_i32, %c0_i32_0 : i32, i32
  }
  func.func @transform_9(%arg0: i32) -> (i32, i32, i32) {
    %c0_i32 = arith.constant 0 : i32
    %c0_i32_0 = arith.constant 0 : i32
    %c0_i32_1 = arith.constant 0 : i32
    return %arg0, %c0_i32, %c0_i32_0 : i32, i32, i32
  }
}

module attributes {stable_mosaic.version = 11 : i64} {
  func.func @_apply_kernel(%arg0: i32, %arg1: memref<8x5xf32, #tpu.memory_space<vmem>>, %arg2: memref<5x64xf32, #tpu.memory_space<vmem>>, %arg3: memref<1x64xf32, #tpu.memory_space<vmem>>, %arg4: memref<1x64xf32, #tpu.memory_space<vmem>>, %arg5: memref<1x64xf32, #tpu.memory_space<vmem>>, %arg6: memref<1x64xf32, #tpu.memory_space<vmem>>, %arg7: memref<64x64xf32, #tpu.memory_space<vmem>>, %arg8: memref<1x64xf32, #tpu.memory_space<vmem>>, %arg9: memref<1x64xf32, #tpu.memory_space<vmem>>, %arg10: memref<1x64xf32, #tpu.memory_space<vmem>>, %arg11: memref<1x64xf32, #tpu.memory_space<vmem>>, %arg12: memref<64x256xf32, #tpu.memory_space<vmem>>, %arg13: memref<1x256xf32, #tpu.memory_space<vmem>>, %arg14: memref<8x256xf32, #tpu.memory_space<vmem>>) attributes {dimension_semantics = [#tpu.dimension_semantics<parallel>], iteration_bounds = array<i64: 1>, scalar_prefetch = 0 : i64, scratch_operands = 0 : i64, tpu.core_type = #tpu.core_type<tc>, window_params = [{transform_indices = @transform_0, window_bounds = array<i64: 8, 5>}, {pipeline_mode = #tpu.pipeline_mode<synchronous>, transform_indices = @transform_1, window_bounds = array<i64: 5, 64>}, {pipeline_mode = #tpu.pipeline_mode<synchronous>, transform_indices = @transform_2, window_bounds = array<i64: 1, 64>}, {pipeline_mode = #tpu.pipeline_mode<synchronous>, transform_indices = @transform_3, window_bounds = array<i64: 1, 64>}, {pipeline_mode = #tpu.pipeline_mode<synchronous>, transform_indices = @transform_4, window_bounds = array<i64: 1, 64>}, {pipeline_mode = #tpu.pipeline_mode<synchronous>, transform_indices = @transform_5, window_bounds = array<i64: 1, 64>}, {pipeline_mode = #tpu.pipeline_mode<synchronous>, transform_indices = @transform_6, window_bounds = array<i64: 64, 64>}, {pipeline_mode = #tpu.pipeline_mode<synchronous>, transform_indices = @transform_7, window_bounds = array<i64: 1, 64>}, {pipeline_mode = #tpu.pipeline_mode<synchronous>, transform_indices = @transform_8, window_bounds = array<i64: 1, 64>}, {pipeline_mode = #tpu.pipeline_mode<synchronous>, transform_indices = @transform_9, window_bounds = array<i64: 1, 64>}, {pipeline_mode = #tpu.pipeline_mode<synchronous>, transform_indices = @transform_10, window_bounds = array<i64: 1, 64>}, {pipeline_mode = #tpu.pipeline_mode<synchronous>, transform_indices = @transform_11, window_bounds = array<i64: 64, 256>}, {pipeline_mode = #tpu.pipeline_mode<synchronous>, transform_indices = @transform_12, window_bounds = array<i64: 1, 256>}, {transform_indices = @transform_13, window_bounds = array<i64: 8, 256>}]} {
    %c0 = arith.constant 0 : index
    %c0_0 = arith.constant 0 : index
    %0 = vector.load %arg1[%c0, %c0_0] : memref<8x5xf32, #tpu.memory_space<vmem>>, vector<8x5xf32>
    %c0_1 = arith.constant 0 : index
    %c0_2 = arith.constant 0 : index
    %1 = vector.load %arg2[%c0_1, %c0_2] : memref<5x64xf32, #tpu.memory_space<vmem>>, vector<5x64xf32>
    %cst = arith.constant dense<0.000000e+00> : vector<8x64xf32>
    %2 = tpu.matmul %0, %1, %cst {dimension_numbers = #tpu.dot_dimension_numbers<[1], [0], [0], [1], [0, 0, 1, 1], [], []>} : vector<8x5xf32>, vector<5x64xf32>, vector<8x64xf32> -> vector<8x64xf32>
    %c0_3 = arith.constant 0 : index
    %c0_4 = arith.constant 0 : index
    %3 = vector.load %arg3[%c0_3, %c0_4] : memref<1x64xf32, #tpu.memory_space<vmem>>, vector<1x64xf32>
    %4 = vector.broadcast %3 : vector<1x64xf32> to vector<8x64xf32>
    %5 = arith.addf %2, %4 : vector<8x64xf32>
    %c0_5 = arith.constant 0 : index
    %c0_6 = arith.constant 0 : index
    %6 = vector.load %arg4[%c0_5, %c0_6] : memref<1x64xf32, #tpu.memory_space<vmem>>, vector<1x64xf32>
    %7 = vector.broadcast %6 : vector<1x64xf32> to vector<8x64xf32>
    %8 = arith.mulf %7, %5 : vector<8x64xf32>
    %9 = math.tanh %8 : vector<8x64xf32>
    %cst_7 = arith.constant 5.000000e-01 : f32
    %10 = vector.broadcast %cst_7 : f32 to vector<8x64xf32>
    %11 = arith.mulf %10, %9 : vector<8x64xf32>
    %cst_8 = arith.constant 5.000000e-01 : f32
    %12 = vector.broadcast %cst_8 : f32 to vector<8x64xf32>
    %13 = arith.addf %12, %11 : vector<8x64xf32>
    %14 = arith.mulf %5, %13 : vector<8x64xf32>
    %c0_9 = arith.constant 0 : index
    %c0_10 = arith.constant 0 : index
    %15 = vector.load %arg5[%c0_9, %c0_10] : memref<1x64xf32, #tpu.memory_space<vmem>>, vector<1x64xf32>
    %16 = vector.broadcast %15 : vector<1x64xf32> to vector<8x64xf32>
    %17 = arith.subf %14, %16 : vector<8x64xf32>
    %c0_11 = arith.constant 0 : index
    %c0_12 = arith.constant 0 : index
    %18 = vector.load %arg6[%c0_11, %c0_12] : memref<1x64xf32, #tpu.memory_space<vmem>>, vector<1x64xf32>
    %19 = vector.broadcast %18 : vector<1x64xf32> to vector<8x64xf32>
    %20 = arith.mulf %17, %19 : vector<8x64xf32>
    %c0_13 = arith.constant 0 : index
    %c0_14 = arith.constant 0 : index
    %21 = vector.load %arg7[%c0_13, %c0_14] : memref<64x64xf32, #tpu.memory_space<vmem>>, vector<64x64xf32>
    %cst_15 = arith.constant dense<0.000000e+00> : vector<8x64xf32>
    %22 = tpu.matmul %20, %21, %cst_15 {dimension_numbers = #tpu.dot_dimension_numbers<[1], [0], [0], [1], [0, 0, 1, 1], [], []>} : vector<8x64xf32>, vector<64x64xf32>, vector<8x64xf32> -> vector<8x64xf32>
    %c0_16 = arith.constant 0 : index
    %c0_17 = arith.constant 0 : index
    %23 = vector.load %arg8[%c0_16, %c0_17] : memref<1x64xf32, #tpu.memory_space<vmem>>, vector<1x64xf32>
    %24 = vector.broadcast %23 : vector<1x64xf32> to vector<8x64xf32>
    %25 = arith.addf %22, %24 : vector<8x64xf32>
    %c0_18 = arith.constant 0 : index
    %c0_19 = arith.constant 0 : index
    %26 = vector.load %arg9[%c0_18, %c0_19] : memref<1x64xf32, #tpu.memory_space<vmem>>, vector<1x64xf32>
    %27 = vector.broadcast %26 : vector<1x64xf32> to vector<8x64xf32>
    %28 = arith.mulf %27, %25 : vector<8x64xf32>
    %29 = math.tanh %28 : vector<8x64xf32>
    %cst_20 = arith.constant 5.000000e-01 : f32
    %30 = vector.broadcast %cst_20 : f32 to vector<8x64xf32>
    %31 = arith.mulf %30, %29 : vector<8x64xf32>
    %cst_21 = arith.constant 5.000000e-01 : f32
    %32 = vector.broadcast %cst_21 : f32 to vector<8x64xf32>
    %33 = arith.addf %32, %31 : vector<8x64xf32>
    %34 = arith.mulf %25, %33 : vector<8x64xf32>
    %c0_22 = arith.constant 0 : index
    %c0_23 = arith.constant 0 : index
    %35 = vector.load %arg10[%c0_22, %c0_23] : memref<1x64xf32, #tpu.memory_space<vmem>>, vector<1x64xf32>
    %36 = vector.broadcast %35 : vector<1x64xf32> to vector<8x64xf32>
    %37 = arith.subf %34, %36 : vector<8x64xf32>
    %c0_24 = arith.constant 0 : index
    %c0_25 = arith.constant 0 : index
    %38 = vector.load %arg11[%c0_24, %c0_25] : memref<1x64xf32, #tpu.memory_space<vmem>>, vector<1x64xf32>
    %39 = vector.broadcast %38 : vector<1x64xf32> to vector<8x64xf32>
    %40 = arith.mulf %37, %39 : vector<8x64xf32>
    %c0_26 = arith.constant 0 : index
    %c0_27 = arith.constant 0 : index
    %41 = vector.load %arg12[%c0_26, %c0_27] : memref<64x256xf32, #tpu.memory_space<vmem>>, vector<64x256xf32>
    %cst_28 = arith.constant dense<0.000000e+00> : vector<8x256xf32>
    %42 = tpu.matmul %40, %41, %cst_28 {dimension_numbers = #tpu.dot_dimension_numbers<[1], [0], [0], [1], [0, 0, 1, 1], [], []>} : vector<8x64xf32>, vector<64x256xf32>, vector<8x256xf32> -> vector<8x256xf32>
    %c0_29 = arith.constant 0 : index
    %c0_30 = arith.constant 0 : index
    %43 = vector.load %arg13[%c0_29, %c0_30] : memref<1x256xf32, #tpu.memory_space<vmem>>, vector<1x256xf32>
    %44 = vector.broadcast %43 : vector<1x256xf32> to vector<8x256xf32>
    %45 = arith.addf %42, %44 : vector<8x256xf32>
    %cst_31 = arith.constant 0.000000e+00 : f32
    %46 = vector.broadcast %cst_31 : f32 to vector<8x256xf32>
    %47 = arith.maximumf %45, %46 : vector<8x256xf32>
    %c0_32 = arith.constant 0 : index
    %c0_33 = arith.constant 0 : index
    %48 = vector.load %arg14[%c0_32, %c0_33] : memref<8x256xf32, #tpu.memory_space<vmem>>, vector<8x256xf32>
    tpu.vector_store %arg14[%c0_32, %c0_33], %47 {strides = array<i32>} : memref<8x256xf32, #tpu.memory_space<vmem>>, vector<8x256xf32>,
    return
  }
  func.func @transform_0(%arg0: i32) -> (i32, i32) {
    %c0_i32 = arith.constant 0 : i32
    %c0_i32_0 = arith.constant 0 : i32
    return %arg0, %c0_i32 : i32, i32
  }
  func.func @transform_1(%arg0: i32) -> (i32, i32) {
    %c0_i32 = arith.constant 0 : i32
    %c0_i32_0 = arith.constant 0 : i32
    %c0_i32_1 = arith.constant 0 : i32
    return %c0_i32, %c0_i32_0 : i32, i32
  }
  func.func @transform_2(%arg0: i32) -> (i32, i32) {
    %c0_i32 = arith.constant 0 : i32
    %c0_i32_0 = arith.constant 0 : i32
    %c0_i32_1 = arith.constant 0 : i32
    return %c0_i32, %c0_i32_0 : i32, i32
  }
  func.func @transform_3(%arg0: i32) -> (i32, i32) {
    %c0_i32 = arith.constant 0 : i32
    %c0_i32_0 = arith.constant 0 : i32
    %c0_i32_1 = arith.constant 0 : i32
    return %c0_i32, %c0_i32_0 : i32, i32
  }
  func.func @transform_4(%arg0: i32) -> (i32, i32) {
    %c0_i32 = arith.constant 0 : i32
    %c0_i32_0 = arith.constant 0 : i32
    %c0_i32_1 = arith.constant 0 : i32
    return %c0_i32, %c0_i32_0 : i32, i32
  }
  func.func @transform_5(%arg0: i32) -> (i32, i32) {
    %c0_i32 = arith.constant 0 : i32
    %c0_i32_0 = arith.constant 0 : i32
    %c0_i32_1 = arith.constant 0 : i32
    return %c0_i32, %c0_i32_0 : i32, i32
  }
  func.func @transform_6(%arg0: i32) -> (i32, i32) {
    %c0_i32 = arith.constant 0 : i32
    %c0_i32_0 = arith.constant 0 : i32
    %c0_i32_1 = arith.constant 0 : i32
    return %c0_i32, %c0_i32_0 : i32, i32
  }
  func.func @transform_7(%arg0: i32) -> (i32, i32) {
    %c0_i32 = arith.constant 0 : i32
    %c0_i32_0 = arith.constant 0 : i32
    %c0_i32_1 = arith.constant 0 : i32
    return %c0_i32, %c0_i32_0 : i32, i32
  }
  func.func @transform_8(%arg0: i32) -> (i32, i32) {
    %c0_i32 = arith.constant 0 : i32
    %c0_i32_0 = arith.constant 0 : i32
    %c0_i32_1 = arith.constant 0 : i32
    return %c0_i32, %c0_i32_0 : i32, i32
  }
  func.func @transform_9(%arg0: i32) -> (i32, i32) {
    %c0_i32 = arith.constant 0 : i32
    %c0_i32_0 = arith.constant 0 : i32
    %c0_i32_1 = arith.constant 0 : i32
    return %c0_i32, %c0_i32_0 : i32, i32
  }
  func.func @transform_10(%arg0: i32) -> (i32, i32) {
    %c0_i32 = arith.constant 0 : i32
    %c0_i32_0 = arith.constant 0 : i32
    %c0_i32_1 = arith.constant 0 : i32
    return %c0_i32, %c0_i32_0 : i32, i32
  }
  func.func @transform_11(%arg0: i32) -> (i32, i32) {
    %c0_i32 = arith.constant 0 : i32
    %c0_i32_0 = arith.constant 0 : i32
    %c0_i32_1 = arith.constant 0 : i32
    return %c0_i32, %c0_i32_0 : i32, i32
  }
  func.func @transform_12(%arg0: i32) -> (i32, i32) {
    %c0_i32 = arith.constant 0 : i32
    %c0_i32_0 = arith.constant 0 : i32
    %c0_i32_1 = arith.constant 0 : i32
    return %c0_i32, %c0_i32_0 : i32, i32
  }
  func.func @transform_13(%arg0: i32) -> (i32, i32) {
    %c0_i32 = arith.constant 0 : i32
    %c0_i32_0 = arith.constant 0 : i32
    return %arg0, %c0_i32 : i32, i32
  }
}

</mosaic_0001>

<llo_original>
// kernel: fc_decoder_forward.3
$region0: #{fc_decoder_forward.3}
  #allocation0 [shape = 'u32[]', space=smem, size = 0x4, offset = 0x4, fixed_abs, tag = 'smem constant byte address 0x4 - core index']
  #allocation1 [shape = 'u32[144,128]{1,0:T(1,128)}', space=vmem, size = 0x12000, scoped, tag = 'internal scratch']
  %s0 = inlined_call_operand.vmem [shape: f32[8,5], index: 0, kind: input, shape index: {}]
  %s1 = inlined_call_operand.vmem [shape: f32[5,64], index: 1, kind: input, shape index: {}]
  %s2 = inlined_call_operand.vmem [shape: f32[1,64], index: 2, kind: input, shape index: {}]
  %s3 = inlined_call_operand.vmem [shape: f32[1,64], index: 3, kind: input, shape index: {}]
  %s4 = inlined_call_operand.vmem [shape: f32[1,1,128], index: 4, kind: output, shape index: {}]
  %s5 = sld [smem:[#allocation0]]
  $region26: #{fc_decoder_forward.3} parent=0
    _
  %s7 = ssub.s32 1, %s5
  %s8 = scalar_select 0, %s7, %s5
  // Predicated region
  $region2: #{fc_decoder_forward.3} parent=0 // pred_check
    _
  $region3: #{fc_decoder_forward.3} parent=0 // pred_check_branch
    %10 = sbr.rel (0) target = $region5
  $region4: #{fc_decoder_forward.3} parent=0 // pred_region
    _
  $region5: #{fc_decoder_forward.3} parent=0 // pred_fallthru
    _
  // Predicated region
  $region6: #{fc_decoder_forward.3} parent=0 // pred_check
    _
  $region7: #{fc_decoder_forward.3} parent=0 // pred_check_branch
    %12 = sbr.rel (0) target = $region9
  $region8: #{fc_decoder_forward.3} parent=0 // pred_region
    _
  $region9: #{fc_decoder_forward.3} parent=0 // pred_fallthru
    _
  // Predicated region
  $region10: #{fc_decoder_forward.3} parent=0 // pred_check
    _
  $region11: #{fc_decoder_forward.3} parent=0 // pred_check_branch
    %14 = sbr.rel (0) target = $region13
  $region12: #{fc_decoder_forward.3} parent=0 // pred_region
    _
  $region13: #{fc_decoder_forward.3} parent=0 // pred_fallthru
    _
  // Predicated region
  $region14: #{fc_decoder_forward.3} parent=0 // pred_check
    _
  $region15: #{fc_decoder_forward.3} parent=0 // pred_check_branch
    %16 = sbr.rel (0) target = $region17
  $region16: #{fc_decoder_forward.3} parent=0 // pred_region
    _
  $region17: #{fc_decoder_forward.3} parent=0 // pred_fallthru
    _
  %v17 = vld [vmem:[%s0] sm:$0xff]
  %v18 = vld [vmem:[%s1] sm:$0x1f]
  %v19 = vld [vmem:[%s2] sm:$0x1]
  %v21 = vlaneseq
  %v22 = vshrl.u32 %v21, 7
  %v23 = vsub.s32 0, %v22
  %v24 = vrot.slane %v19, %v23
  %vm26 = vcmask 39936
  %v28 = vsel %vm26, %v17, 0
  %vm30 = vcmask 1044480
  %v32 = vsel %vm30, %v18, 0
  %34 = vmatprep.subr.mxu0 0.0
  %35 = vmatpush1.msra.mxu0 %v32
  %36 = vmatprep.subr.mxu0 0.0
  %37 = vmatpush1.msra.mxu0 0.0
  %38 = vmatprep.subr.mxu0 0.0
  %39 = vmatpush1.msra.mxu0 0.0
  %40 = vmatprep.subr.mxu0 0.0
  %41 = vmatpush1.msra.mxu0 0.0
  %42 = vmatprep.subr.mxu0 0.0
  %43 = vmatpush1.msra.mxu0 0.0
  %44 = vmatprep.subr.mxu0 0.0
  %45 = vmatpush1.msra.mxu0 0.0
  %46 = vmatprep.subr.mxu0 0.0
  %47 = vmatpush1.msra.mxu0 0.0
  %48 = vmatprep.subr.mxu0 0.0
  %49 = vmatpush1.msra.mxu0 0.0
  %50 = vmatprep.subr.mxu0 0.0
  %51 = vmatpush1.msra.mxu0 0.0
  %52 = vmatprep.subr.mxu0 0.0
  %53 = vmatpush1.msra.mxu0 0.0
  %54 = vmatprep.subr.mxu0 0.0
  %55 = vmatpush1.msra.mxu0 0.0
  %56 = vmatprep.subr.mxu0 0.0
  %57 = vmatpush1.msra.mxu0 0.0
  %58 = vmatprep.subr.mxu0 0.0
  %59 = vmatpush1.msra.mxu0 0.0
  %60 = vmatprep.subr.mxu0 0.0
  %61 = vmatpush1.msra.mxu0 0.0
  %62 = vmatprep.subr.mxu0 0.0
  %63 = vmatpush1.msra.mxu0 0.0
  %64 = vmatprep.subr.mxu0 0.0
  %65 = vmatpush1.msra.mxu0 0.0
  %66 = vmatprep.subr.mxu0 0.0
  %67 = vmatpush1.msra.mxu0 0.0
  %68 = vmatprep.subr.mxu0 0.0
  %69 = vmatpush1.msra.mxu0 0.0
  %70 = vmatprep.subr.mxu0 0.0
  %71 = vmatpush1.msra.mxu0 0.0
  %72 = vmatprep.subr.mxu0 0.0
  %73 = vmatpush1.msra.mxu0 0.0
  %74 = vmatprep.subr.mxu0 0.0
  %75 = vmatpush1.msra.mxu0 0.0
  %76 = vmatprep.subr.mxu0 0.0
  %77 = vmatpush1.msra.mxu0 0.0
  %78 = vmatprep.subr.mxu0 0.0
  %79 = vmatpush1.msra.mxu0 0.0
  %80 = vmatprep.subr.mxu0 0.0
  %81 = vmatpush1.msra.mxu0 0.0
  %82 = vmatprep.subr.mxu0 0.0
  %83 = vmatpush1.msra.mxu0 0.0
  %84 = vmatprep.subr.mxu0 0.0
  %85 = vmatpush1.msra.mxu0 0.0
  %86 = vmatprep.subr.mxu0 0.0
  %87 = vmatpush1.msra.mxu0 0.0
  %88 = vmatprep.subr.mxu0 0.0
  %89 = vmatpush1.msra.mxu0 0.0
  %90 = vmatprep.subr.mxu0 0.0
  %91 = vmatpush1.msra.mxu0 0.0
  %92 = vmatprep.subr.mxu0 0.0
  %93 = vmatpush1.msra.mxu0 0.0
  %94 = vmatprep.subr.mxu0 0.0
  %95 = vmatpush1.msra.mxu0 0.0
  %96 = vmatprep.subr.mxu0 0.0
  %97 = vmatpush1.msra.mxu0 0.0
  %98 = vmatprep.mubr.f32.mxu0 0.0
  %99 = vmatmul.mubr.f32.gmra.mrb[0].mxu0 %v28
  %v100 = vpop.f32.mrb[0].mxu0
  %v101 = vadd.f32 %v24, %v100
  %v102 = vpop.f32.mrb[0].mxu0
  %103 = vdwg.mxu0
  %v104 = vld [vmem:[%s3] sm:$0x1]
  %v106 = vlaneseq
  %v107 = vshrl.u32 %v106, 7
  %v108 = vsub.s32 0, %v107
  %v109 = vrot.slane %v104, %v108
  %v111 = vmul.f32 %v109, %v101
  %v112 = vtanh.pop %v111
  %v113 = vmul.f32 %v112, 0.5
  %v114 = vadd.f32 %v113, 0.5
  %v115 = vmul.f32 %v101, %v114
  %s116 = smul.u32 0, 8
  %v117 = vlaneseq
  %v118 = vand.u32 %v117, 127
  %v119 = vstv %s116
  %v120 = vadd.s32 %v119, %v118
  %vm121 = vcmp.lt.s32.totalorder %v120, 8
  %v122 = vsel %vm121, 1, 0
  %v123 = vcvt.s32.f32 %v122
  %v124 = vmul.f32 %v115, %v115
  %126 = vrot.lane.b32.xlu0 %v124, 64
  %v127 = vpop.permute.xlu0 %126
  %vm129 = vcmask 523264
  %v130 = vsel %vm129, %v115, %v127
  %vm131 = vcmask 64512
  %v133 = vsel %vm131, %v123, 0
  %135 = vmatprep.subr.mxu0 0.0
  %136 = vmatpush1.msra.mxu0 %v130
  %137 = vmatprep.subr.mxu0 0.0
  %138 = vmatpush1.msra.mxu0 0.0
  %139 = vmatprep.subr.mxu0 0.0
  %140 = vmatpush1.msra.mxu0 0.0
  %141 = vmatprep.subr.mxu0 0.0
  %142 = vmatpush1.msra.mxu0 0.0
  %143 = vmatprep.subr.mxu0 0.0
  %144 = vmatpush1.msra.mxu0 0.0
  %145 = vmatprep.subr.mxu0 0.0
  %146 = vmatpush1.msra.mxu0 0.0
  %147 = vmatprep.subr.mxu0 0.0
  %148 = vmatpush1.msra.mxu0 0.0
  %149 = vmatprep.subr.mxu0 0.0
  %150 = vmatpush1.msra.mxu0 0.0
  %151 = vmatprep.subr.mxu0 0.0
  %152 = vmatpush1.msra.mxu0 0.0
  %153 = vmatprep.subr.mxu0 0.0
  %154 = vmatpush1.msra.mxu0 0.0
  %155 = vmatprep.subr.mxu0 0.0
  %156 = vmatpush1.msra.mxu0 0.0
  %157 = vmatprep.subr.mxu0 0.0
  %158 = vmatpush1.msra.mxu0 0.0
  %159 = vmatprep.subr.mxu0 0.0
  %160 = vmatpush1.msra.mxu0 0.0
  %161 = vmatprep.subr.mxu0 0.0
  %162 = vmatpush1.msra.mxu0 0.0
  %163 = vmatprep.subr.mxu0 0.0
  %164 = vmatpush1.msra.mxu0 0.0
  %165 = vmatprep.subr.mxu0 0.0
  %166 = vmatpush1.msra.mxu0 0.0
  %167 = vmatprep.subr.mxu0 0.0
  %168 = vmatpush1.msra.mxu0 0.0
  %169 = vmatprep.subr.mxu0 0.0
  %170 = vmatpush1.msra.mxu0 0.0
  %171 = vmatprep.subr.mxu0 0.0
  %172 = vmatpush1.msra.mxu0 0.0
  %173 = vmatprep.subr.mxu0 0.0
  %174 = vmatpush1.msra.mxu0 0.0
  %175 = vmatprep.subr.mxu0 0.0
  %176 = vmatpush1.msra.mxu0 0.0
  %177 = vmatprep.subr.mxu0 0.0
  %178 = vmatpush1.msra.mxu0 0.0
  %179 = vmatprep.subr.mxu0 0.0
  %180 = vmatpush1.msra.mxu0 0.0
  %181 = vmatprep.subr.mxu0 0.0
  %182 = vmatpush1.msra.mxu0 0.0
  %183 = vmatprep.subr.mxu0 0.0
  %184 = vmatpush1.msra.mxu0 0.0
  %185 = vmatprep.subr.mxu0 0.0
  %186 = vmatpush1.msra.mxu0 0.0
  %187 = vmatprep.subr.mxu0 0.0
  %188 = vmatpush1.msra.mxu0 0.0
  %189 = vmatprep.subr.mxu0 0.0
  %190 = vmatpush1.msra.mxu0 0.0
  %191 = vmatprep.subr.mxu0 0.0
  %192 = vmatpush1.msra.mxu0 0.0
  %193 = vmatprep.subr.mxu0 0.0
  %194 = vmatpush1.msra.mxu0 0.0
  %195 = vmatprep.subr.mxu0 0.0
  %196 = vmatpush1.msra.mxu0 0.0
  %197 = vmatprep.subr.mxu0 0.0
  %198 = vmatpush1.msra.mxu0 0.0
  %199 = vmatprep.mubr.f32.mxu0 0.0
  %200 = vmatmul.mubr.f32.gmra.mrb[0].mxu0 %v133
  %v201 = vpop.f32.mrb[0].mxu0
  %v202 = vadd.f32 0.0, %v201
  %v203 = vpop.f32.mrb[0].mxu0
  %204 = vdwg.mxu0
  %205 = vst [vmem:[%s4] sm:$0x1] %v202
  // Predicated region
  $region18: #{fc_decoder_forward.3} parent=0 // pred_check
    _
  $region19: #{fc_decoder_forward.3} parent=0 // pred_check_branch
    %207 = sbr.rel (0) target = $region21
  $region20: #{fc_decoder_forward.3} parent=0 // pred_region
    _
  $region21: #{fc_decoder_forward.3} parent=0 // pred_fallthru
    _
  // Predicated region
  $region22: #{fc_decoder_forward.3} parent=0 // pred_check
    _
  $region23: #{fc_decoder_forward.3} parent=0 // pred_check_branch
    %209 = sbr.rel (0) target = $region25
  $region24: #{fc_decoder_forward.3} parent=0 // pred_region
    _
  $region25: #{fc_decoder_forward.3} parent=0 // pred_fallthru
    _

// kernel: fc_decoder_forward.4
$region0: #{fc_decoder_forward.4}
  #allocation0 [shape = 'u32[]', space=smem, size = 0x4, offset = 0x4, fixed_abs, tag = 'smem constant byte address 0x4 - core index']
  #allocation1 [shape = 'u32[144,128]{1,0:T(1,128)}', space=vmem, size = 0x12000, scoped, tag = 'internal scratch']
  %s0 = inlined_call_operand.vmem [shape: f32[8,5], index: 0, kind: input, shape index: {}]
  %s1 = inlined_call_operand.vmem [shape: f32[5,64], index: 1, kind: input, shape index: {}]
  %s2 = inlined_call_operand.vmem [shape: f32[1,64], index: 2, kind: input, shape index: {}]
  %s3 = inlined_call_operand.vmem [shape: f32[1,64], index: 3, kind: input, shape index: {}]
  %s4 = inlined_call_operand.vmem [shape: f32[1,64], index: 4, kind: input, shape index: {}]
  %s5 = inlined_call_operand.vmem [shape: f32[1,64], index: 5, kind: input, shape index: {}]
  %s6 = inlined_call_operand.hbm [shape: f32[64,64], index: 6, kind: input, shape index: {}]
  %s7 = inlined_call_operand.vmem [shape: f32[1,64], index: 7, kind: input, shape index: {}]
  %s8 = inlined_call_operand.vmem [shape: f32[1,64], index: 8, kind: input, shape index: {}]
  %s9 = inlined_call_operand.vmem [shape: f32[1,1,128], index: 9, kind: output, shape index: {}]
  %s10 = sld [smem:[#allocation0]]
  $region50: #{fc_decoder_forward.4} parent=0
    _
  %s12 = ssub.s32 1, %s10
  %s13 = scalar_select 0, %s12, %s10
  $region1: #{fc_decoder_forward.4} parent=0
    #allocation2 [shape = 'u8[32768]{0}', space=vmem, size = 0x8000, scoped, tag = 'input window, operand 6, single buffered']
    #allocation3 [shape = 's32[1]{0}', space=sflag, size = 0x4, scoped, tag = 'scoped memory for fc_decoder_forward.4']
    %14 = vsyncpa [#allocation3], 0
    // Predicated region
    $region2: #{fc_decoder_forward.4} parent=1 // pred_check
      _
    $region3: #{fc_decoder_forward.4} parent=1 // pred_check_branch
      %16 = sbr.rel (0) target = $region5
    $region4: #{fc_decoder_forward.4} parent=1 // pred_region
      _
    $region5: #{fc_decoder_forward.4} parent=1 // pred_fallthru
      _
    // Predicated region
    $region6: #{fc_decoder_forward.4} parent=1 // pred_check
      _
    $region7: #{fc_decoder_forward.4} parent=1 // pred_check_branch
      %18 = sbr.rel (0) target = $region9
    $region8: #{fc_decoder_forward.4} parent=1 // pred_region
      _
    $region9: #{fc_decoder_forward.4} parent=1 // pred_fallthru
      _
    // Predicated region
    $region10: #{fc_decoder_forward.4} parent=1 // pred_check
      _
    $region11: #{fc_decoder_forward.4} parent=1 // pred_check_branch
      %20 = sbr.rel (0) target = $region13
    $region12: #{fc_decoder_forward.4} parent=1 // pred_region
      _
    $region13: #{fc_decoder_forward.4} parent=1 // pred_fallthru
      _
    // Predicated region
    $region14: #{fc_decoder_forward.4} parent=1 // pred_check
      _
    $region15: #{fc_decoder_forward.4} parent=1 // pred_check_branch
      %22 = sbr.rel (0) target = $region17
    $region16: #{fc_decoder_forward.4} parent=1 // pred_region
      _
    $region17: #{fc_decoder_forward.4} parent=1 // pred_fallthru
      _
    // Predicated region
    $region18: #{fc_decoder_forward.4} parent=1 // pred_check
      _
    $region19: #{fc_decoder_forward.4} parent=1 // pred_check_branch
      %24 = sbr.rel (0) target = $region21
    $region20: #{fc_decoder_forward.4} parent=1 // pred_region
      _
    $region21: #{fc_decoder_forward.4} parent=1 // pred_fallthru
      _
    // Predicated region
    $region22: #{fc_decoder_forward.4} parent=1 // pred_check
      _
    $region23: #{fc_decoder_forward.4} parent=1 // pred_check_branch
      %26 = sbr.rel (0) target = $region25
    $region24: #{fc_decoder_forward.4} parent=1 // pred_region
      _
    $region25: #{fc_decoder_forward.4} parent=1 // pred_fallthru
      _
    // Predicated region
    $region26: #{fc_decoder_forward.4} parent=1 // pred_check
      _
    $region27: #{fc_decoder_forward.4} parent=1 // pred_check_branch
      %28 = sbr.rel (0) target = $region29
    $region28: #{fc_decoder_forward.4} parent=1 // pred_region
      %s30 = ssub.s32 1024, 1024
      %31 = vsyncadd [#allocation3], %s30
      %s32 = sshll.u32 [#allocation2], 4
      %s33 = int_to_ptr.vmem [resolvable:$true] %s32
      %38 = dma.hbm_to_vmem [thread:$0]  %s6, 1024, %s33, [#allocation3], 128, 128, 8
    $region29: #{fc_decoder_forward.4} parent=1 // pred_fallthru
      _
    // Predicated region
    $region30: #{fc_decoder_forward.4} parent=1 // pred_check
      _
    $region31: #{fc_decoder_forward.4} parent=1 // pred_check_branch
      %40 = sbr.rel (0) target = $region33
    $region32: #{fc_decoder_forward.4} parent=1 // pred_region
      _
    $region33: #{fc_decoder_forward.4} parent=1 // pred_fallthru
      _
    // Predicated region
    $region34: #{fc_decoder_forward.4} parent=1 // pred_check
      _
    $region35: #{fc_decoder_forward.4} parent=1 // pred_check_branch
      %42 = sbr.rel (0) target = $region37
    $region36: #{fc_decoder_forward.4} parent=1 // pred_region
      _
    $region37: #{fc_decoder_forward.4} parent=1 // pred_fallthru
      _
    // Predicated region
    $region38: #{fc_decoder_forward.4} parent=1 // pred_check
      _
    $region39: #{fc_decoder_forward.4} parent=1 // pred_check_branch
      %44 = sbr.rel (0) target = $region41
    $region40: #{fc_decoder_forward.4} parent=1 // pred_region
      %45 = dma.done [#allocation3], 1024
    $region41: #{fc_decoder_forward.4} parent=1 // pred_fallthru
      _
    %v46 = vld [vmem:[%s0] sm:$0xff]
    %v47 = vld [vmem:[%s1] sm:$0x1f]
    %v48 = vld [vmem:[%s2] sm:$0x1]
    %v50 = vlaneseq
    %v51 = vshrl.u32 %v50, 7
    %v52 = vsub.s32 0, %v51
    %v53 = vrot.slane %v48, %v52
    %vm55 = vcmask 39936
    %v57 = vsel %vm55, %v46, 0
    %vm59 = vcmask 1044480
    %v61 = vsel %vm59, %v47, 0
    %63 = vmatprep.subr.mxu0 0.0
    %64 = vmatpush1.msra.mxu0 %v61
    %65 = vmatprep.subr.mxu0 0.0
    %66 = vmatpush1.msra.mxu0 0.0
    %67 = vmatprep.subr.mxu0 0.0
    %68 = vmatpush1.msra.mxu0 0.0
    %69 = vmatprep.subr.mxu0 0.0
    %70 = vmatpush1.msra.mxu0 0.0
    %71 = vmatprep.subr.mxu0 0.0
    %72 = vmatpush1.msra.mxu0 0.0
    %73 = vmatprep.subr.mxu0 0.0
    %74 = vmatpush1.msra.mxu0 0.0
    %75 = vmatprep.subr.mxu0 0.0
    %76 = vmatpush1.msra.mxu0 0.0
    %77 = vmatprep.subr.mxu0 0.0
    %78 = vmatpush1.msra.mxu0 0.0
    %79 = vmatprep.subr.mxu0 0.0
    %80 = vmatpush1.msra.mxu0 0.0
    %81 = vmatprep.subr.mxu0 0.0
    %82 = vmatpush1.msra.mxu0 0.0
    %83 = vmatprep.subr.mxu0 0.0
    %84 = vmatpush1.msra.mxu0 0.0
    %85 = vmatprep.subr.mxu0 0.0
    %86 = vmatpush1.msra.mxu0 0.0
    %87 = vmatprep.subr.mxu0 0.0
    %88 = vmatpush1.msra.mxu0 0.0
    %89 = vmatprep.subr.mxu0 0.0
    %90 = vmatpush1.msra.mxu0 0.0
    %91 = vmatprep.subr.mxu0 0.0
    %92 = vmatpush1.msra.mxu0 0.0
    %93 = vmatprep.subr.mxu0 0.0
    %94 = vmatpush1.msra.mxu0 0.0
    %95 = vmatprep.subr.mxu0 0.0
    %96 = vmatpush1.msra.mxu0 0.0
    %97 = vmatprep.subr.mxu0 0.0
    %98 = vmatpush1.msra.mxu0 0.0
    %99 = vmatprep.subr.mxu0 0.0
    %100 = vmatpush1.msra.mxu0 0.0
    %101 = vmatprep.subr.mxu0 0.0
    %102 = vmatpush1.msra.mxu0 0.0
    %103 = vmatprep.subr.mxu0 0.0
    %104 = vmatpush1.msra.mxu0 0.0
    %105 = vmatprep.subr.mxu0 0.0
    %106 = vmatpush1.msra.mxu0 0.0
    %107 = vmatprep.subr.mxu0 0.0
    %108 = vmatpush1.msra.mxu0 0.0
    %109 = vmatprep.subr.mxu0 0.0
    %110 = vmatpush1.msra.mxu0 0.0
    %111 = vmatprep.subr.mxu0 0.0
    %112 = vmatpush1.msra.mxu0 0.0
    %113 = vmatprep.subr.mxu0 0.0
    %114 = vmatpush1.msra.mxu0 0.0
    %115 = vmatprep.subr.mxu0 0.0
    %116 = vmatpush1.msra.mxu0 0.0
    %117 = vmatprep.subr.mxu0 0.0
    %118 = vmatpush1.msra.mxu0 0.0
    %119 = vmatprep.subr.mxu0 0.0
    %120 = vmatpush1.msra.mxu0 0.0
    %121 = vmatprep.subr.mxu0 0.0
    %122 = vmatpush1.msra.mxu0 0.0
    %123 = vmatprep.subr.mxu0 0.0
    %124 = vmatpush1.msra.mxu0 0.0
    %125 = vmatprep.subr.mxu0 0.0
    %126 = vmatpush1.msra.mxu0 0.0
    %127 = vmatprep.mubr.f32.mxu0 0.0
    %128 = vmatmul.mubr.f32.gmra.mrb[0].mxu0 %v57
    %v129 = vpop.f32.mrb[0].mxu0
    %v130 = vadd.f32 %v53, %v129
    %v131 = vpop.f32.mrb[0].mxu0
    %132 = vdwg.mxu0
    %v133 = vld [vmem:[%s3] sm:$0x1]
    %v135 = vlaneseq
    %v136 = vshrl.u32 %v135, 7
    %v137 = vsub.s32 0, %v136
    %v138 = vrot.slane %v133, %v137
    %v140 = vmul.f32 %v138, %v130
    %v141 = vtanh.pop %v140
    %v142 = vmul.f32 %v141, 0.5
    %v143 = vadd.f32 %v142, 0.5
    %v144 = vmul.f32 %v130, %v143
    %v145 = vld [vmem:[%s4] sm:$0x1]
    %v147 = vlaneseq
    %v148 = vshrl.u32 %v147, 7
    %v149 = vsub.s32 0, %v148
    %v150 = vrot.slane %v145, %v149
    %v152 = vsub.f32 %v144, %v150
    %v153 = vld [vmem:[%s5] sm:$0x1]
    %v155 = vlaneseq
    %v156 = vshrl.u32 %v155, 7
    %v157 = vsub.s32 0, %v156
    %v158 = vrot.slane %v153, %v157
    %v160 = vmul.f32 %v152, %v158
    %v161 = vld [vmem:[#allocation2] sm:$0xff]
    %v162 = vld [vmem:[#allocation2 + $0x8] sm:$0xff]
    %v163 = vld [vmem:[#allocation2 + $0x10] sm:$0xff]
    %v164 = vld [vmem:[#allocation2 + $0x18] sm:$0xff]
    %v165 = vld [vmem:[#allocation2 + $0x20] sm:$0xff]
    %v166 = vld [vmem:[#allocation2 + $0x28] sm:$0xff]
    %v167 = vld [vmem:[#allocation2 + $0x30] sm:$0xff]
    %v168 = vld [vmem:[#allocation2 + $0x38] sm:$0xff]
    %v169 = vld [vmem:[%s7] sm:$0x1]
    %v171 = vlaneseq
    %v172 = vshrl.u32 %v171, 7
    %v173 = vsub.s32 0, %v172
    %v174 = vrot.slane %v169, %v173
    %vm176 = vcmask 523264
    %v178 = vsel %vm176, %v160, 0
    %180 = vmatprep.subr.mxu0 0.0
    %181 = vmatpush1.msra.mxu0 %v161
    %182 = vmatprep.subr.mxu0 0.0
    %183 = vmatpush1.msra.mxu0 %v162
    %184 = vmatprep.subr.mxu0 0.0
    %185 = vmatpush1.msra.mxu0 %v163
    %186 = vmatprep.subr.mxu0 0.0
    %187 = vmatpush1.msra.mxu0 %v164
    %188 = vmatprep.subr.mxu0 0.0
    %189 = vmatpush1.msra.mxu0 %v165
    %190 = vmatprep.subr.mxu0 0.0
    %191 = vmatpush1.msra.mxu0 %v166
    %192 = vmatprep.subr.mxu0 0.0
    %193 = vmatpush1.msra.mxu0 %v167
    %194 = vmatprep.subr.mxu0 0.0
    %195 = vmatpush1.msra.mxu0 %v168
    %196 = vmatprep.subr.mxu0 0.0
    %197 = vmatpush1.msra.mxu0 0.0
    %198 = vmatprep.subr.mxu0 0.0
    %199 = vmatpush1.msra.mxu0 0.0
    %200 = vmatprep.subr.mxu0 0.0
    %201 = vmatpush1.msra.mxu0 0.0
    %202 = vmatprep.subr.mxu0 0.0
    %203 = vmatpush1.msra.mxu0 0.0
    %204 = vmatprep.subr.mxu0 0.0
    %205 = vmatpush1.msra.mxu0 0.0
    %206 = vmatprep.subr.mxu0 0.0
    %207 = vmatpush1.msra.mxu0 0.0
    %208 = vmatprep.subr.mxu0 0.0
    %209 = vmatpush1.msra.mxu0 0.0
    %210 = vmatprep.subr.mxu0 0.0
    %211 = vmatpush1.msra.mxu0 0.0
    %212 = vmatprep.subr.mxu0 0.0
    %213 = vmatpush1.msra.mxu0 0.0
    %214 = vmatprep.subr.mxu0 0.0
    %215 = vmatpush1.msra.mxu0 0.0
    %216 = vmatprep.subr.mxu0 0.0
    %217 = vmatpush1.msra.mxu0 0.0
    %218 = vmatprep.subr.mxu0 0.0
    %219 = vmatpush1.msra.mxu0 0.0
    %220 = vmatprep.subr.mxu0 0.0
    %221 = vmatpush1.msra.mxu0 0.0
    %222 = vmatprep.subr.mxu0 0.0
    %223 = vmatpush1.msra.mxu0 0.0
    %224 = vmatprep.subr.mxu0 0.0
    %225 = vmatpush1.msra.mxu0 0.0
    %226 = vmatprep.subr.mxu0 0.0
    %227 = vmatpush1.msra.mxu0 0.0
    %228 = vmatprep.subr.mxu0 0.0
    %229 = vmatpush1.msra.mxu0 0.0
    %230 = vmatprep.subr.mxu0 0.0
    %231 = vmatpush1.msra.mxu0 0.0
    %232 = vmatprep.subr.mxu0 0.0
    %233 = vmatpush1.msra.mxu0 0.0
    %234 = vmatprep.subr.mxu0 0.0
    %235 = vmatpush1.msra.mxu0 0.0
    %236 = vmatprep.subr.mxu0 0.0
    %237 = vmatpush1.msra.mxu0 0.0
    %238 = vmatprep.subr.mxu0 0.0
    %239 = vmatpush1.msra.mxu0 0.0
    %240 = vmatprep.subr.mxu0 0.0
    %241 = vmatpush1.msra.mxu0 0.0
    %242 = vmatprep.subr.mxu0 0.0
    %243 = vmatpush1.msra.mxu0 0.0
    %244 = vmatprep.mubr.f32.mxu0 0.0
    %245 = vmatmul.mubr.f32.gmra.mrb[0].mxu0 %v178
    %v246 = vpop.f32.mrb[0].mxu0
    %v247 = vadd.f32 %v174, %v246
    %v248 = vpop.f32.mrb[0].mxu0
    %249 = vdwg.mxu0
    %v250 = vld [vmem:[%s8] sm:$0x1]
    %v252 = vlaneseq
    %v253 = vshrl.u32 %v252, 7
    %v254 = vsub.s32 0, %v253
    %v255 = vrot.slane %v250, %v254
    %v257 = vmul.f32 %v255, %v247
    %v258 = vtanh.pop %v257
    %v259 = vmul.f32 %v258, 0.5
    %v260 = vadd.f32 %v259, 0.5
    %v261 = vmul.f32 %v247, %v260
    %s262 = smul.u32 0, 8
    %v263 = vlaneseq
    %v264 = vand.u32 %v263, 127
    %v265 = vstv %s262
    %v266 = vadd.s32 %v265, %v264
    %vm267 = vcmp.lt.s32.totalorder %v266, 8
    %v268 = vsel %vm267, 1, 0
    %v269 = vcvt.s32.f32 %v268
    %v270 = vmul.f32 %v261, %v261
    %272 = vrot.lane.b32.xlu0 %v270, 64
    %v273 = vpop.permute.xlu0 %272
    %v275 = vsel %vm176, %v261, %v273
    %vm276 = vcmask 64512
    %v278 = vsel %vm276, %v269, 0
    %280 = vmatprep.subr.mxu0 0.0
    %281 = vmatpush1.msra.mxu0 %v275
    %282 = vmatprep.subr.mxu0 0.0
    %283 = vmatpush1.msra.mxu0 0.0
    %284 = vmatprep.subr.mxu0 0.0
    %285 = vmatpush1.msra.mxu0 0.0
    %286 = vmatprep.subr.mxu0 0.0
    %287 = vmatpush1.msra.mxu0 0.0
    %288 = vmatprep.subr.mxu0 0.0
    %289 = vmatpush1.msra.mxu0 0.0
    %290 = vmatprep.subr.mxu0 0.0
    %291 = vmatpush1.msra.mxu0 0.0
    %292 = vmatprep.subr.mxu0 0.0
    %293 = vmatpush1.msra.mxu0 0.0
    %294 = vmatprep.subr.mxu0 0.0
    %295 = vmatpush1.msra.mxu0 0.0
    %296 = vmatprep.subr.mxu0 0.0
    %297 = vmatpush1.msra.mxu0 0.0
    %298 = vmatprep.subr.mxu0 0.0
    %299 = vmatpush1.msra.mxu0 0.0
    %300 = vmatprep.subr.mxu0 0.0
    %301 = vmatpush1.msra.mxu0 0.0
    %302 = vmatprep.subr.mxu0 0.0
    %303 = vmatpush1.msra.mxu0 0.0
    %304 = vmatprep.subr.mxu0 0.0
    %305 = vmatpush1.msra.mxu0 0.0
    %306 = vmatprep.subr.mxu0 0.0
    %307 = vmatpush1.msra.mxu0 0.0
    %308 = vmatprep.subr.mxu0 0.0
    %309 = vmatpush1.msra.mxu0 0.0
    %310 = vmatprep.subr.mxu0 0.0
    %311 = vmatpush1.msra.mxu0 0.0
    %312 = vmatprep.subr.mxu0 0.0
    %313 = vmatpush1.msra.mxu0 0.0
    %314 = vmatprep.subr.mxu0 0.0
    %315 = vmatpush1.msra.mxu0 0.0
    %316 = vmatprep.subr.mxu0 0.0
    %317 = vmatpush1.msra.mxu0 0.0
    %318 = vmatprep.subr.mxu0 0.0
    %319 = vmatpush1.msra.mxu0 0.0
    %320 = vmatprep.subr.mxu0 0.0
    %321 = vmatpush1.msra.mxu0 0.0
    %322 = vmatprep.subr.mxu0 0.0
    %323 = vmatpush1.msra.mxu0 0.0
    %324 = vmatprep.subr.mxu0 0.0
    %325 = vmatpush1.msra.mxu0 0.0
    %326 = vmatprep.subr.mxu0 0.0
    %327 = vmatpush1.msra.mxu0 0.0
    %328 = vmatprep.subr.mxu0 0.0
    %329 = vmatpush1.msra.mxu0 0.0
    %330 = vmatprep.subr.mxu0 0.0
    %331 = vmatpush1.msra.mxu0 0.0
    %332 = vmatprep.subr.mxu0 0.0
    %333 = vmatpush1.msra.mxu0 0.0
    %334 = vmatprep.subr.mxu0 0.0
    %335 = vmatpush1.msra.mxu0 0.0
    %336 = vmatprep.subr.mxu0 0.0
    %337 = vmatpush1.msra.mxu0 0.0
    %338 = vmatprep.subr.mxu0 0.0
    %339 = vmatpush1.msra.mxu0 0.0
    %340 = vmatprep.subr.mxu0 0.0
    %341 = vmatpush1.msra.mxu0 0.0
    %342 = vmatprep.subr.mxu0 0.0
    %343 = vmatpush1.msra.mxu0 0.0
    %344 = vmatprep.mubr.f32.mxu0 0.0
    %345 = vmatmul.mubr.f32.gmra.mrb[0].mxu0 %v278
    %v346 = vpop.f32.mrb[0].mxu0
    %v347 = vadd.f32 0.0, %v346
    %v348 = vpop.f32.mrb[0].mxu0
    %349 = vdwg.mxu0
    %350 = vst [vmem:[%s9] sm:$0x1] %v347
    // Predicated region
    $region42: #{fc_decoder_forward.4} parent=1 // pred_check
      _
    $region43: #{fc_decoder_forward.4} parent=1 // pred_check_branch
      %352 = sbr.rel (0) target = $region45
    $region44: #{fc_decoder_forward.4} parent=1 // pred_region
      _
    $region45: #{fc_decoder_forward.4} parent=1 // pred_fallthru
      _
    // Predicated region
    $region46: #{fc_decoder_forward.4} parent=1 // pred_check
      _
    $region47: #{fc_decoder_forward.4} parent=1 // pred_check_branch
      %354 = sbr.rel (0) target = $region49
    $region48: #{fc_decoder_forward.4} parent=1 // pred_region
      _
    $region49: #{fc_decoder_forward.4} parent=1 // pred_fallthru
      _
    %355 = vsyncpa [#allocation3], 1

// kernel: fc_decoder_forward.5
$region0: #{fc_decoder_forward.5}
  #allocation0 [shape = 'u32[]', space=smem, size = 0x4, offset = 0x4, fixed_abs, tag = 'smem constant byte address 0x4 - core index']
  #allocation1 [shape = 'u32[144,128]{1,0:T(1,128)}', space=vmem, size = 0x12000, scoped, tag = 'internal scratch']
  %s0 = inlined_call_operand.vmem [shape: f32[8,5], index: 0, kind: input, shape index: {}]
  %s1 = inlined_call_operand.vmem [shape: f32[5,64], index: 1, kind: input, shape index: {}]
  %s2 = inlined_call_operand.vmem [shape: f32[1,64], index: 2, kind: input, shape index: {}]
  %s3 = inlined_call_operand.vmem [shape: f32[1,64], index: 3, kind: input, shape index: {}]
  %s4 = inlined_call_operand.vmem [shape: f32[1,64], index: 4, kind: input, shape index: {}]
  %s5 = inlined_call_operand.vmem [shape: f32[1,64], index: 5, kind: input, shape index: {}]
  %s6 = inlined_call_operand.vmem [shape: f32[64,64], index: 6, kind: input, shape index: {}]
  %s7 = inlined_call_operand.vmem [shape: f32[1,64], index: 7, kind: input, shape index: {}]
  %s8 = inlined_call_operand.vmem [shape: f32[1,64], index: 8, kind: input, shape index: {}]
  %s9 = inlined_call_operand.vmem [shape: f32[1,64], index: 9, kind: input, shape index: {}]
  %s10 = inlined_call_operand.vmem [shape: f32[1,64], index: 10, kind: input, shape index: {}]
  %s11 = inlined_call_operand.hbm [shape: f32[64,256], index: 11, kind: input, shape index: {}]
  %s12 = inlined_call_operand.vmem [shape: f32[1,256], index: 12, kind: input, shape index: {}]
  %s13 = inlined_call_operand.hbm [shape: f32[8,256], index: 13, kind: output, shape index: {}]
  %s14 = sld [smem:[#allocation0]]
  $region66: #{fc_decoder_forward.5} parent=0
    _
  %s16 = ssub.s32 1, %s14
  %s17 = scalar_select 0, %s16, %s14
  $region1: #{fc_decoder_forward.5} parent=0
    #allocation2 [shape = 'u8[65536]{0}', space=vmem, size = 0x10000, scoped, tag = 'input window, operand 11, single buffered']
    #allocation3 [shape = 's32[1]{0}', space=sflag, size = 0x4, scoped, tag = 'scoped memory for fc_decoder_forward.5']
    #allocation4 [shape = 's32[1]{0}', space=sflag, size = 0x4, scoped, tag = 'scoped memory for fc_decoder_forward.5']
    #allocation5 [shape = 'u8[8192]{0}', space=vmem, size = 0x2000, scoped, tag = 'output window, operand 0, single buffered']
    %18 = vsyncpa [#allocation3], 0
    %19 = vsyncpa [#allocation4], 0
    // Predicated region
    $region2: #{fc_decoder_forward.5} parent=1 // pred_check
      _
    $region3: #{fc_decoder_forward.5} parent=1 // pred_check_branch
      %21 = sbr.rel (0) target = $region5
    $region4: #{fc_decoder_forward.5} parent=1 // pred_region
      _
    $region5: #{fc_decoder_forward.5} parent=1 // pred_fallthru
      _
    // Predicated region
    $region6: #{fc_decoder_forward.5} parent=1 // pred_check
      _
    $region7: #{fc_decoder_forward.5} parent=1 // pred_check_branch
      %23 = sbr.rel (0) target = $region9
    $region8: #{fc_decoder_forward.5} parent=1 // pred_region
      _
    $region9: #{fc_decoder_forward.5} parent=1 // pred_fallthru
      _
    // Predicated region
    $region10: #{fc_decoder_forward.5} parent=1 // pred_check
      _
    $region11: #{fc_decoder_forward.5} parent=1 // pred_check_branch
      %25 = sbr.rel (0) target = $region13
    $region12: #{fc_decoder_forward.5} parent=1 // pred_region
      _
    $region13: #{fc_decoder_forward.5} parent=1 // pred_fallthru
      _
    // Predicated region
    $region14: #{fc_decoder_forward.5} parent=1 // pred_check
      _
    $region15: #{fc_decoder_forward.5} parent=1 // pred_check_branch
      %27 = sbr.rel (0) target = $region17
    $region16: #{fc_decoder_forward.5} parent=1 // pred_region
      _
    $region17: #{fc_decoder_forward.5} parent=1 // pred_fallthru
      _
    // Predicated region
    $region18: #{fc_decoder_forward.5} parent=1 // pred_check
      _
    $region19: #{fc_decoder_forward.5} parent=1 // pred_check_branch
      %29 = sbr.rel (0) target = $region21
    $region20: #{fc_decoder_forward.5} parent=1 // pred_region
      _
    $region21: #{fc_decoder_forward.5} parent=1 // pred_fallthru
      _
    // Predicated region
    $region22: #{fc_decoder_forward.5} parent=1 // pred_check
      _
    $region23: #{fc_decoder_forward.5} parent=1 // pred_check_branch
      %31 = sbr.rel (0) target = $region25
    $region24: #{fc_decoder_forward.5} parent=1 // pred_region
      _
    $region25: #{fc_decoder_forward.5} parent=1 // pred_fallthru
      _
    // Predicated region
    $region26: #{fc_decoder_forward.5} parent=1 // pred_check
      _
    $region27: #{fc_decoder_forward.5} parent=1 // pred_check_branch
      %33 = sbr.rel (0) target = $region29
    $region28: #{fc_decoder_forward.5} parent=1 // pred_region
      _
    $region29: #{fc_decoder_forward.5} parent=1 // pred_fallthru
      _
    // Predicated region
    $region30: #{fc_decoder_forward.5} parent=1 // pred_check
      _
    $region31: #{fc_decoder_forward.5} parent=1 // pred_check_branch
      %35 = sbr.rel (0) target = $region33
    $region32: #{fc_decoder_forward.5} parent=1 // pred_region
      _
    $region33: #{fc_decoder_forward.5} parent=1 // pred_fallthru
      _
    // Predicated region
    $region34: #{fc_decoder_forward.5} parent=1 // pred_check
      _
    $region35: #{fc_decoder_forward.5} parent=1 // pred_check_branch
      %37 = sbr.rel (0) target = $region37
    $region36: #{fc_decoder_forward.5} parent=1 // pred_region
      _
    $region37: #{fc_decoder_forward.5} parent=1 // pred_fallthru
      _
    // Predicated region
    $region38: #{fc_decoder_forward.5} parent=1 // pred_check
      _
    $region39: #{fc_decoder_forward.5} parent=1 // pred_check_branch
      %39 = sbr.rel (0) target = $region41
    $region40: #{fc_decoder_forward.5} parent=1 // pred_region
      _
    $region41: #{fc_decoder_forward.5} parent=1 // pred_fallthru
      _
    // Predicated region
    $region42: #{fc_decoder_forward.5} parent=1 // pred_check
      _
    $region43: #{fc_decoder_forward.5} parent=1 // pred_check_branch
      %41 = sbr.rel (0) target = $region45
    $region44: #{fc_decoder_forward.5} parent=1 // pred_region
      _
    $region45: #{fc_decoder_forward.5} parent=1 // pred_fallthru
      _
    // Predicated region
    $region46: #{fc_decoder_forward.5} parent=1 // pred_check
      _
    $region47: #{fc_decoder_forward.5} parent=1 // pred_check_branch
      %43 = sbr.rel (0) target = $region49
    $region48: #{fc_decoder_forward.5} parent=1 // pred_region
      %s45 = ssub.s32 2048, 2048
      %46 = vsyncadd [#allocation3], %s45
      %s47 = sshll.u32 [#allocation2], 4
      %s48 = int_to_ptr.vmem [resolvable:$true] %s47
      %53 = dma.hbm_to_vmem [thread:$0]  %s11, 2048, %s48, [#allocation3], 256, 256, 16
    $region49: #{fc_decoder_forward.5} parent=1 // pred_fallthru
      _
    // Predicated region
    $region50: #{fc_decoder_forward.5} parent=1 // pred_check
      _
    $region51: #{fc_decoder_forward.5} parent=1 // pred_check_branch
      %55 = sbr.rel (0) target = $region53
    $region52: #{fc_decoder_forward.5} parent=1 // pred_region
      _
    $region53: #{fc_decoder_forward.5} parent=1 // pred_fallthru
      _
    // Predicated region
    $region54: #{fc_decoder_forward.5} parent=1 // pred_check
      _
    $region55: #{fc_decoder_forward.5} parent=1 // pred_check_branch
      %57 = sbr.rel (0) target = $region57
    $region56: #{fc_decoder_forward.5} parent=1 // pred_region
      %58 = dma.done [#allocation3], 2048
    $region57: #{fc_decoder_forward.5} parent=1 // pred_fallthru
      _
    %v59 = vld [vmem:[%s0] sm:$0xff]
    %v60 = vld [vmem:[%s1] sm:$0x1f]
    %v61 = vld [vmem:[%s2] sm:$0x1]
    %v63 = vlaneseq
    %v64 = vshrl.u32 %v63, 7
    %v65 = vsub.s32 0, %v64
    %v66 = vrot.slane %v61, %v65
    %vm68 = vcmask 39936
    %v70 = vsel %vm68, %v59, 0
    %vm72 = vcmask 1044480
    %v74 = vsel %vm72, %v60, 0
    %76 = vmatprep.subr.mxu0 0.0
    %77 = vmatpush1.msra.mxu0 %v74
    %78 = vmatprep.subr.mxu0 0.0
    %79 = vmatpush1.msra.mxu0 0.0
    %80 = vmatprep.subr.mxu0 0.0
    %81 = vmatpush1.msra.mxu0 0.0
    %82 = vmatprep.subr.mxu0 0.0
    %83 = vmatpush1.msra.mxu0 0.0
    %84 = vmatprep.subr.mxu0 0.0
    %85 = vmatpush1.msra.mxu0 0.0
    %86 = vmatprep.subr.mxu0 0.0
    %87 = vmatpush1.msra.mxu0 0.0
    %88 = vmatprep.subr.mxu0 0.0
    %89 = vmatpush1.msra.mxu0 0.0
    %90 = vmatprep.subr.mxu0 0.0
    %91 = vmatpush1.msra.mxu0 0.0
    %92 = vmatprep.subr.mxu0 0.0
    %93 = vmatpush1.msra.mxu0 0.0
    %94 = vmatprep.subr.mxu0 0.0
    %95 = vmatpush1.msra.mxu0 0.0
    %96 = vmatprep.subr.mxu0 0.0
    %97 = vmatpush1.msra.mxu0 0.0
    %98 = vmatprep.subr.mxu0 0.0
    %99 = vmatpush1.msra.mxu0 0.0
    %100 = vmatprep.subr.mxu0 0.0
    %101 = vmatpush1.msra.mxu0 0.0
    %102 = vmatprep.subr.mxu0 0.0
    %103 = vmatpush1.msra.mxu0 0.0
    %104 = vmatprep.subr.mxu0 0.0
    %105 = vmatpush1.msra.mxu0 0.0
    %106 = vmatprep.subr.mxu0 0.0
    %107 = vmatpush1.msra.mxu0 0.0
    %108 = vmatprep.subr.mxu0 0.0
    %109 = vmatpush1.msra.mxu0 0.0
    %110 = vmatprep.subr.mxu0 0.0
    %111 = vmatpush1.msra.mxu0 0.0
    %112 = vmatprep.subr.mxu0 0.0
    %113 = vmatpush1.msra.mxu0 0.0
    %114 = vmatprep.subr.mxu0 0.0
    %115 = vmatpush1.msra.mxu0 0.0
    %116 = vmatprep.subr.mxu0 0.0
    %117 = vmatpush1.msra.mxu0 0.0
    %118 = vmatprep.subr.mxu0 0.0
    %119 = vmatpush1.msra.mxu0 0.0
    %120 = vmatprep.subr.mxu0 0.0
    %121 = vmatpush1.msra.mxu0 0.0
    %122 = vmatprep.subr.mxu0 0.0
    %123 = vmatpush1.msra.mxu0 0.0
    %124 = vmatprep.subr.mxu0 0.0
    %125 = vmatpush1.msra.mxu0 0.0
    %126 = vmatprep.subr.mxu0 0.0
    %127 = vmatpush1.msra.mxu0 0.0
    %128 = vmatprep.subr.mxu0 0.0
    %129 = vmatpush1.msra.mxu0 0.0
    %130 = vmatprep.subr.mxu0 0.0
    %131 = vmatpush1.msra.mxu0 0.0
    %132 = vmatprep.subr.mxu0 0.0
    %133 = vmatpush1.msra.mxu0 0.0
    %134 = vmatprep.subr.mxu0 0.0
    %135 = vmatpush1.msra.mxu0 0.0
    %136 = vmatprep.subr.mxu0 0.0
    %137 = vmatpush1.msra.mxu0 0.0
    %138 = vmatprep.subr.mxu0 0.0
    %139 = vmatpush1.msra.mxu0 0.0
    %140 = vmatprep.mubr.f32.mxu0 0.0
    %141 = vmatmul.mubr.f32.gmra.mrb[0].mxu0 %v70
    %v142 = vpop.f32.mrb[0].mxu0
    %v143 = vadd.f32 %v66, %v142
    %v144 = vpop.f32.mrb[0].mxu0
    %145 = vdwg.mxu0
    %v146 = vld [vmem:[%s3] sm:$0x1]
    %v148 = vlaneseq
    %v149 = vshrl.u32 %v148, 7
    %v150 = vsub.s32 0, %v149
    %v151 = vrot.slane %v146, %v150
    %v153 = vmul.f32 %v151, %v143
    %v154 = vtanh.pop %v153
    %v155 = vmul.f32 %v154, 0.5
    %v156 = vadd.f32 %v155, 0.5
    %v157 = vmul.f32 %v143, %v156
    %v158 = vld [vmem:[%s4] sm:$0x1]
    %v160 = vlaneseq
    %v161 = vshrl.u32 %v160, 7
    %v162 = vsub.s32 0, %v161
    %v163 = vrot.slane %v158, %v162
    %v165 = vsub.f32 %v157, %v163
    %v166 = vld [vmem:[%s5] sm:$0x1]
    %v168 = vlaneseq
    %v169 = vshrl.u32 %v168, 7
    %v170 = vsub.s32 0, %v169
    %v171 = vrot.slane %v166, %v170
    %v173 = vmul.f32 %v165, %v171
    %v174 = vld [vmem:[%s6] sm:$0xff]
    %v175 = vld [vmem:[%s6 + $0x8] sm:$0xff]
    %v176 = vld [vmem:[%s6 + $0x10] sm:$0xff]
    %v177 = vld [vmem:[%s6 + $0x18] sm:$0xff]
    %v178 = vld [vmem:[%s6 + $0x20] sm:$0xff]
    %v179 = vld [vmem:[%s6 + $0x28] sm:$0xff]
    %v180 = vld [vmem:[%s6 + $0x30] sm:$0xff]
    %v181 = vld [vmem:[%s6 + $0x38] sm:$0xff]
    %v182 = vld [vmem:[%s7] sm:$0x1]
    %v184 = vlaneseq
    %v185 = vshrl.u32 %v184, 7
    %v186 = vsub.s32 0, %v185
    %v187 = vrot.slane %v182, %v186
    %vm189 = vcmask 523264
    %v191 = vsel %vm189, %v173, 0
    %193 = vmatprep.subr.mxu0 0.0
    %194 = vmatpush1.msra.mxu0 %v174
    %195 = vmatprep.subr.mxu0 0.0
    %196 = vmatpush1.msra.mxu0 %v175
    %197 = vmatprep.subr.mxu0 0.0
    %198 = vmatpush1.msra.mxu0 %v176
    %199 = vmatprep.subr.mxu0 0.0
    %200 = vmatpush1.msra.mxu0 %v177
    %201 = vmatprep.subr.mxu0 0.0
    %202 = vmatpush1.msra.mxu0 %v178
    %203 = vmatprep.subr.mxu0 0.0
    %204 = vmatpush1.msra.mxu0 %v179
    %205 = vmatprep.subr.mxu0 0.0
    %206 = vmatpush1.msra.mxu0 %v180
    %207 = vmatprep.subr.mxu0 0.0
    %208 = vmatpush1.msra.mxu0 %v181
    %209 = vmatprep.subr.mxu0 0.0
    %210 = vmatpush1.msra.mxu0 0.0
    %211 = vmatprep.subr.mxu0 0.0
    %212 = vmatpush1.msra.mxu0 0.0
    %213 = vmatprep.subr.mxu0 0.0
    %214 = vmatpush1.msra.mxu0 0.0
    %215 = vmatprep.subr.mxu0 0.0
    %216 = vmatpush1.msra.mxu0 0.0
    %217 = vmatprep.subr.mxu0 0.0
    %218 = vmatpush1.msra.mxu0 0.0
    %219 = vmatprep.subr.mxu0 0.0
    %220 = vmatpush1.msra.mxu0 0.0
    %221 = vmatprep.subr.mxu0 0.0
    %222 = vmatpush1.msra.mxu0 0.0
    %223 = vmatprep.subr.mxu0 0.0
    %224 = vmatpush1.msra.mxu0 0.0
    %225 = vmatprep.subr.mxu0 0.0
    %226 = vmatpush1.msra.mxu0 0.0
    %227 = vmatprep.subr.mxu0 0.0
    %228 = vmatpush1.msra.mxu0 0.0
    %229 = vmatprep.subr.mxu0 0.0
    %230 = vmatpush1.msra.mxu0 0.0
    %231 = vmatprep.subr.mxu0 0.0
    %232 = vmatpush1.msra.mxu0 0.0
    %233 = vmatprep.subr.mxu0 0.0
    %234 = vmatpush1.msra.mxu0 0.0
    %235 = vmatprep.subr.mxu0 0.0
    %236 = vmatpush1.msra.mxu0 0.0
    %237 = vmatprep.subr.mxu0 0.0
    %238 = vmatpush1.msra.mxu0 0.0
    %239 = vmatprep.subr.mxu0 0.0
    %240 = vmatpush1.msra.mxu0 0.0
    %241 = vmatprep.subr.mxu0 0.0
    %242 = vmatpush1.msra.mxu0 0.0
    %243 = vmatprep.subr.mxu0 0.0
    %244 = vmatpush1.msra.mxu0 0.0
    %245 = vmatprep.subr.mxu0 0.0
    %246 = vmatpush1.msra.mxu0 0.0
    %247 = vmatprep.subr.mxu0 0.0
    %248 = vmatpush1.msra.mxu0 0.0
    %249 = vmatprep.subr.mxu0 0.0
    %250 = vmatpush1.msra.mxu0 0.0
    %251 = vmatprep.subr.mxu0 0.0
    %252 = vmatpush1.msra.mxu0 0.0
    %253 = vmatprep.subr.mxu0 0.0
    %254 = vmatpush1.msra.mxu0 0.0
    %255 = vmatprep.subr.mxu0 0.0
    %256 = vmatpush1.msra.mxu0 0.0
    %257 = vmatprep.mubr.f32.mxu0 0.0
    %258 = vmatmul.mubr.f32.gmra.mrb[0].mxu0 %v191
    %v259 = vpop.f32.mrb[0].mxu0
    %v260 = vadd.f32 %v187, %v259
    %v261 = vpop.f32.mrb[0].mxu0
    %262 = vdwg.mxu0
    %v263 = vld [vmem:[%s8] sm:$0x1]
    %v265 = vlaneseq
    %v266 = vshrl.u32 %v265, 7
    %v267 = vsub.s32 0, %v266
    %v268 = vrot.slane %v263, %v267
    %v270 = vmul.f32 %v268, %v260
    %v271 = vtanh.pop %v270
    %v272 = vmul.f32 %v271, 0.5
    %v273 = vadd.f32 %v272, 0.5
    %v274 = vmul.f32 %v260, %v273
    %v275 = vld [vmem:[%s9] sm:$0x1]
    %v277 = vlaneseq
    %v278 = vshrl.u32 %v277, 7
    %v279 = vsub.s32 0, %v278
    %v280 = vrot.slane %v275, %v279
    %v282 = vsub.f32 %v274, %v280
    %v283 = vld [vmem:[%s10] sm:$0x1]
    %v285 = vlaneseq
    %v286 = vshrl.u32 %v285, 7
    %v287 = vsub.s32 0, %v286
    %v288 = vrot.slane %v283, %v287
    %v290 = vmul.f32 %v282, %v288
    %v291 = vld [vmem:[#allocation2] sm:$0xff]
    %v292 = vld [vmem:[#allocation2 + $0x8] sm:$0xff]
    %v293 = vld [vmem:[#allocation2 + $0x10] sm:$0xff]
    %v294 = vld [vmem:[#allocation2 + $0x18] sm:$0xff]
    %v295 = vld [vmem:[#allocation2 + $0x20] sm:$0xff]
    %v296 = vld [vmem:[#allocation2 + $0x28] sm:$0xff]
    %v297 = vld [vmem:[#allocation2 + $0x30] sm:$0xff]
    %v298 = vld [vmem:[#allocation2 + $0x38] sm:$0xff]
    %v299 = vld [vmem:[#allocation2 + $0x40] sm:$0xff]
    %v300 = vld [vmem:[#allocation2 + $0x48] sm:$0xff]
    %v301 = vld [vmem:[#allocation2 + $0x50] sm:$0xff]
    %v302 = vld [vmem:[#allocation2 + $0x58] sm:$0xff]
    %v303 = vld [vmem:[#allocation2 + $0x60] sm:$0xff]
    %v304 = vld [vmem:[#allocation2 + $0x68] sm:$0xff]
    %v305 = vld [vmem:[#allocation2 + $0x70] sm:$0xff]
    %v306 = vld [vmem:[#allocation2 + $0x78] sm:$0xff]
    %v307 = vld [vmem:[%s12] sm:$0x3]
    %v309 = vlaneseq
    %v310 = vshrl.u32 %v309, 7
    %v311 = vsub.s32 0, %v310
    %v312 = vrot.slane %v307, %v311
    %v313 = vlaneseq
    %v314 = vshrl.u32 %v313, 7
    %v315 = vsub.s32 1, %v314
    %v316 = vrot.slane %v307, %v315
    %v320 = vsel %vm189, %v290, 0
    %322 = vmatprep.subr.mxu0 %v292
    %323 = vmatpush1.msra.mxu0 %v291
    %324 = vmatprep.subr.mxu0 %v294
    %325 = vmatpush1.msra.mxu0 %v293
    %326 = vmatprep.subr.mxu0 %v296
    %327 = vmatpush1.msra.mxu0 %v295
    %328 = vmatprep.subr.mxu0 %v298
    %329 = vmatpush1.msra.mxu0 %v297
    %330 = vmatprep.subr.mxu0 %v300
    %331 = vmatpush1.msra.mxu0 %v299
    %332 = vmatprep.subr.mxu0 %v302
    %333 = vmatpush1.msra.mxu0 %v301
    %334 = vmatprep.subr.mxu0 %v304
    %335 = vmatpush1.msra.mxu0 %v303
    %336 = vmatprep.subr.mxu0 %v306
    %337 = vmatpush1.msra.mxu0 %v305
    %338 = vmatprep.subr.mxu0 0.0
    %339 = vmatpush1.msra.mxu0 0.0
    %340 = vmatprep.subr.mxu0 0.0
    %341 = vmatpush1.msra.mxu0 0.0
    %342 = vmatprep.subr.mxu0 0.0
    %343 = vmatpush1.msra.mxu0 0.0
    %344 = vmatprep.subr.mxu0 0.0
    %345 = vmatpush1.msra.mxu0 0.0
    %346 = vmatprep.subr.mxu0 0.0
    %347 = vmatpush1.msra.mxu0 0.0
    %348 = vmatprep.subr.mxu0 0.0
    %349 = vmatpush1.msra.mxu0 0.0
    %350 = vmatprep.subr.mxu0 0.0
    %351 = vmatpush1.msra.mxu0 0.0
    %352 = vmatprep.subr.mxu0 0.0
    %353 = vmatpush1.msra.mxu0 0.0
    %354 = vmatprep.subr.mxu0 0.0
    %355 = vmatpush1.msra.mxu0 0.0
    %356 = vmatprep.subr.mxu0 0.0
    %357 = vmatpush1.msra.mxu0 0.0
    %358 = vmatprep.subr.mxu0 0.0
    %359 = vmatpush1.msra.mxu0 0.0
    %360 = vmatprep.subr.mxu0 0.0
    %361 = vmatpush1.msra.mxu0 0.0
    %362 = vmatprep.subr.mxu0 0.0
    %363 = vmatpush1.msra.mxu0 0.0
    %364 = vmatprep.subr.mxu0 0.0
    %365 = vmatpush1.msra.mxu0 0.0
    %366 = vmatprep.subr.mxu0 0.0
    %367 = vmatpush1.msra.mxu0 0.0
    %368 = vmatprep.subr.mxu0 0.0
    %369 = vmatpush1.msra.mxu0 0.0
    %370 = vmatprep.subr.mxu0 0.0
    %371 = vmatpush1.msra.mxu0 0.0
    %372 = vmatprep.subr.mxu0 0.0
    %373 = vmatpush1.msra.mxu0 0.0
    %374 = vmatprep.subr.mxu0 0.0
    %375 = vmatpush1.msra.mxu0 0.0
    %376 = vmatprep.subr.mxu0 0.0
    %377 = vmatpush1.msra.mxu0 0.0
    %378 = vmatprep.subr.mxu0 0.0
    %379 = vmatpush1.msra.mxu0 0.0
    %380 = vmatprep.subr.mxu0 0.0
    %381 = vmatpush1.msra.mxu0 0.0
    %382 = vmatprep.subr.mxu0 0.0
    %383 = vmatpush1.msra.mxu0 0.0
    %384 = vmatprep.subr.mxu0 0.0
    %385 = vmatpush1.msra.mxu0 0.0
    %386 = vmatprep.mubr.f32.mxu0 0.0
    %387 = vmatmul.mubr.f32.gmra.mrb[0].mxu0 %v320
    %v388 = vpop.f32.mrb[0].mxu0
    %v389 = vadd.f32 %v312, %v388
    %v390 = vpop.f32.mrb[0].mxu0
    %v391 = vadd.f32 %v316, %v390
    %392 = vdwg.mxu0
    %v393 = vmax.f32 %v389, 0.0
    %v394 = vmax.f32 %v391, 0.0
    %395 = vst [vmem:[#allocation5] sm:$0xff] %v393
    %396 = vst [vmem:[#allocation5 + $0x8] sm:$0xff] %v394
    // Predicated region
    $region58: #{fc_decoder_forward.5} parent=1 // pred_check
      _
    $region59: #{fc_decoder_forward.5} parent=1 // pred_check_branch
      %398 = sbr.rel (0) target = $region61
    $region60: #{fc_decoder_forward.5} parent=1 // pred_region
      %s400 = ssub.s32 256, 256
      %401 = vsyncadd [#allocation4], %s400
      %s403 = sshll.u32 [#allocation5], 4
      %s404 = int_to_ptr.vmem [resolvable:$true] %s403
      %406 = dma.vmem_to_hbm [thread:$0]  %s404, 256, %s13, [#allocation4]
    $region61: #{fc_decoder_forward.5} parent=1 // pred_fallthru
      _
    // Predicated region
    $region62: #{fc_decoder_forward.5} parent=1 // pred_check
      _
    $region63: #{fc_decoder_forward.5} parent=1 // pred_check_branch
      %408 = sbr.rel (0) target = $region65
    $region64: #{fc_decoder_forward.5} parent=1 // pred_region
      %409 = dma.done [#allocation4], 256
    $region65: #{fc_decoder_forward.5} parent=1 // pred_fallthru
      _
    %410 = vsyncpa [#allocation3], 1
    %411 = vsyncpa [#allocation4], 1

</llo_original>
